<compile_context>
chip_gen: v5e
topology: v5e:2x2
jax: 0.10.0
libtpu: 0.0.40
codegen_flags: <defaults>
</compile_context>

<pallas_src>
import functools

import jax
import jax.numpy as jnp
from jax.experimental import pallas as pl
from jax.experimental.pallas import tpu as pltpu

IN_DIM = 784          # 28 * 28
H1, H2, H3 = 256, 64, 256
TEMPERATURE = 0.1


def _explainer_kernel(x_ref, g_ref,
                      w1_ref, b1_ref, w2_ref, b2_ref,
                      w3_ref, b3_ref, w4_ref, b4_ref,
                      out_ref, proba_ref, *, k):
    """One (TB, 784) batch tile: MLP -> proba, k gumbel-softmax samples -> mask."""
    x = x_ref[...]  # float32 (cast in wrapper)

    # ---- MLP f(x): Linear->ReLU->Linear->ReLU->Linear->Tanh->Linear->Sigmoid
    h = jnp.dot(x, w1_ref[...], preferred_element_type=jnp.float32) + b1_ref[...]
    h = jnp.maximum(h, 0.0)
    h = jnp.dot(h, w2_ref[...], preferred_element_type=jnp.float32) + b2_ref[...]
    h = jnp.maximum(h, 0.0)
    h = jnp.dot(h, w3_ref[...], preferred_element_type=jnp.float32) + b3_ref[...]
    h = jnp.tanh(h)
    logits = jnp.dot(h, w4_ref[...], preferred_element_type=jnp.float32) + b4_ref[...]

    proba = jax.nn.sigmoid(logits)
    proba_ref[...] = proba

    # Stable log(sigmoid(logits)) == log(proba): avoids -inf when sigmoid underflows.
    log_p = jnp.minimum(logits, 0.0) - jnp.log1p(jnp.exp(-jnp.abs(logits)))

    inv_t = jnp.float32(1.0 / TEMPERATURE)

    # ---- reparametrize: k gumbel-softmax samples (over the 784 axis), max over k.
    mask = jnp.zeros_like(log_p)      # softmax outputs are > 0, so 0 is a safe floor
    for i in range(k):                # small static trip count; fully unrolled
        g = g_ref[i]                  # (TB, 784) gumbel noise for sample i
        s = (log_p + g) * inv_t
        s = s - jnp.max(s, axis=-1, keepdims=True)
        e = jnp.exp(s)
        sm = e / jnp.sum(e, axis=-1, keepdims=True)
        mask = jnp.maximum(mask, sm)

    out_ref[...] = x * mask


@functools.partial(jax.jit, static_argnames=("k", "tb"))
def explainer_mnist_forward(x, params, noise_key, k, tb=256):
    """x: (B, 1, 28, 28) NCHW, noise_key: jax PRNG key.

    Returns (x * mask reshaped to x.shape, proba of shape (B, 784)).
    """
    B = x.shape[0]
    x_flat = x.reshape(B, -1)
    if x_flat.dtype != jnp.float32:
        x_flat = x_flat.astype(jnp.float32)

    # Batch tiling: TB rows per grid step (TB multiple of 8; pad B up to TB*nb).
    TB = min(tb, B)
    TB = ((TB + 7) // 8) * 8
    Bp = ((B + TB - 1) // TB) * TB
    if Bp != B:
        x_flat = jnp.pad(x_flat, ((0, Bp - B), (0, 0)))
    nb = Bp // TB

    # Gumbel noise: computed once as a fused elementwise XLA op, then streamed
    # per batch tile through the pipelined BlockSpec (double-buffered).
    # Clamp u away from 0/1 so -log(-log(u)) stays finite.
    u = jax.random.uniform(noise_key, (k, Bp, IN_DIM), jnp.float32,
                           minval=1e-7, maxval=1.0 - 1e-7)
    gumbel = -jnp.log(-jnp.log(u))

    w1, b1, w2, b2, w3, b3, w4, b4 = params

    resident = lambda i: (0, 0)          # weights/biases: same block every step
    batched = lambda i: (i, 0)           # x / out / proba: tile i of the batch
    noise_map = lambda i: (0, i, 0)      # gumbel noise: all k samples for tile i

    grid_spec = pltpu.PrefetchScalarGridSpec(
        num_scalar_prefetch=0,
        grid=(nb,),
        in_specs=[
            pl.BlockSpec((TB, IN_DIM), batched),        # x
            pl.BlockSpec((k, TB, IN_DIM), noise_map),   # gumbel noise
            pl.BlockSpec((IN_DIM, H1), resident),       # w1
            pl.BlockSpec((1, H1), resident),            # b1
            pl.BlockSpec((H1, H2), resident),           # w2
            pl.BlockSpec((1, H2), resident),            # b2
            pl.BlockSpec((H2, H3), resident),           # w3
            pl.BlockSpec((1, H3), resident),            # b3
            pl.BlockSpec((H3, IN_DIM), resident),       # w4
            pl.BlockSpec((1, IN_DIM), resident),        # b4
        ],
        out_specs=(
            pl.BlockSpec((TB, IN_DIM), batched),        # x * mask
            pl.BlockSpec((TB, IN_DIM), batched),        # proba
        ),
    )

    out_flat, proba = pl.pallas_call(
        functools.partial(_explainer_kernel, k=k),
        out_shape=(
            jax.ShapeDtypeStruct((Bp, IN_DIM), jnp.float32),
            jax.ShapeDtypeStruct((Bp, IN_DIM), jnp.float32),
        ),
        grid_spec=grid_spec,
        compiler_params=pltpu.CompilerParams(
            dimension_semantics=("parallel",),          # shards batch tiles across TCs
            vmem_limit_bytes=32 << 20,                  # well under v7x's 64 MiB
        ),
    )(x_flat, gumbel, w1, b1, w2, b2, w3, b3, w4, b4)

    if Bp != B:
        out_flat = out_flat[:B]
        proba = proba[:B]
    return out_flat.reshape(x.shape), proba
    # TODO(synk): optional bf16 matmul path + 64->128 hidden-dim padding for the
    # v6e/v7x MXU, and in-kernel hardware PRNG (pltpu.prng_*) once the checker
    # runs on real TPU hardware instead of the interpret fallback.


def init_params(key):
    """Torch nn.Linear-style init; weights (in, out), biases (1, out)."""
    dims = [(IN_DIM, H1), (H1, H2), (H2, H3), (H3, IN_DIM)]
    params = []
    for (fan_in, fan_out) in dims:
        key, kw, kb = jax.random.split(key, 3)
        bound = 1.0 / jnp.sqrt(fan_in)
        w = jax.random.uniform(kw, (fan_in, fan_out), jnp.float32, -bound, bound)
        b = jax.random.uniform(kb, (1, fan_out), jnp.float32, -bound, bound)
        params.extend([w, b])
    return tuple(params)


def _proba_reference(x_flat, params):
    """Pure-JAX MLP (the deterministic part of the forward) for a sanity check."""
    w1, b1, w2, b2, w3, b3, w4, b4 = params
    h = jnp.maximum(x_flat @ w1 + b1, 0.0)
    h = jnp.maximum(h @ w2 + b2, 0.0)
    h = jnp.tanh(h @ w3 + b3)
    return jax.nn.sigmoid(h @ w4 + b4)


if __name__ == "__main__":
    key = jax.random.PRNGKey(0)
    k_params, k_x, k_noise = jax.random.split(key, 3)

    B, K = 8, 3
    params = init_params(k_params)
    x = jax.random.uniform(k_x, (B, 1, 28, 28), jnp.float32)   # MNIST-like NCHW
    masked_x, proba = explainer_mnist_forward(x, params, k_noise, K)
    jax.block_until_ready((masked_x, proba))

    assert masked_x.shape == x.shape
    assert proba.shape == (B, IN_DIM)
    assert bool(jnp.isfinite(masked_x).all()) and bool(jnp.isfinite(proba).all())

    # Deterministic part (proba) must match a pure-JAX reference.
    proba_ref = _proba_reference(x.reshape(B, -1), params)
    assert bool(jnp.allclose(proba, proba_ref, rtol=1e-3, atol=1e-3))

    # Mask is a max over softmaxes -> masked output stays within [0, x].
    assert bool((masked_x >= 0.0).all()) and bool((masked_x <= x + 1e-6).all())

    print("KERNEL_OK")
</pallas_src>

<mosaic_0001>
module attributes {stable_mosaic.version = 11 : i64} {
  func.func @_explainer_kernel(%arg0: i32, %arg1: memref<8x784xf32, #tpu.memory_space<vmem>>, %arg2: memref<3x8x784xf32, #tpu.memory_space<vmem>>, %arg3: memref<784x256xf32, #tpu.memory_space<vmem>>, %arg4: memref<1x256xf32, #tpu.memory_space<vmem>>, %arg5: memref<256x64xf32, #tpu.memory_space<vmem>>, %arg6: memref<1x64xf32, #tpu.memory_space<vmem>>, %arg7: memref<64x256xf32, #tpu.memory_space<vmem>>, %arg8: memref<1x256xf32, #tpu.memory_space<vmem>>, %arg9: memref<256x784xf32, #tpu.memory_space<vmem>>, %arg10: memref<1x784xf32, #tpu.memory_space<vmem>>, %arg11: memref<8x784xf32, #tpu.memory_space<vmem>>, %arg12: memref<8x784xf32, #tpu.memory_space<vmem>>) attributes {dimension_semantics = [#tpu.dimension_semantics<parallel>], iteration_bounds = array<i64: 1>, scalar_prefetch = 0 : i64, scratch_operands = 0 : i64, tpu.core_type = #tpu.core_type<tc>, window_params = [{transform_indices = @transform_0, window_bounds = array<i64: 8, 784>}, {transform_indices = @transform_1, window_bounds = array<i64: 3, 8, 784>}, {pipeline_mode = #tpu.pipeline_mode<synchronous>, transform_indices = @transform_2, window_bounds = array<i64: 784, 256>}, {pipeline_mode = #tpu.pipeline_mode<synchronous>, transform_indices = @transform_3, window_bounds = array<i64: 1, 256>}, {pipeline_mode = #tpu.pipeline_mode<synchronous>, transform_indices = @transform_4, window_bounds = array<i64: 256, 64>}, {pipeline_mode = #tpu.pipeline_mode<synchronous>, transform_indices = @transform_5, window_bounds = array<i64: 1, 64>}, {pipeline_mode = #tpu.pipeline_mode<synchronous>, transform_indices = @transform_6, window_bounds = array<i64: 64, 256>}, {pipeline_mode = #tpu.pipeline_mode<synchronous>, transform_indices = @transform_7, window_bounds = array<i64: 1, 256>}, {pipeline_mode = #tpu.pipeline_mode<synchronous>, transform_indices = @transform_8, window_bounds = array<i64: 256, 784>}, {pipeline_mode = #tpu.pipeline_mode<synchronous>, transform_indices = @transform_9, window_bounds = array<i64: 1, 784>}, {transform_indices = @transform_10, window_bounds = array<i64: 8, 784>}, {transform_indices = @transform_11, window_bounds = array<i64: 8, 784>}]} {
    %c0 = arith.constant 0 : index
    %c0_0 = arith.constant 0 : index
    %0 = vector.load %arg1[%c0, %c0_0] : memref<8x784xf32, #tpu.memory_space<vmem>>, vector<8x784xf32>
    %c0_1 = arith.constant 0 : index
    %c0_2 = arith.constant 0 : index
    %1 = vector.load %arg3[%c0_1, %c0_2] : memref<784x256xf32, #tpu.memory_space<vmem>>, vector<784x256xf32>
    %cst = arith.constant dense<0.000000e+00> : vector<8x256xf32>
    %2 = tpu.matmul %0, %1, %cst {dimension_numbers = #tpu.dot_dimension_numbers<[1], [0], [0], [1], [0, 0, 1, 1], [], []>} : vector<8x784xf32>, vector<784x256xf32>, vector<8x256xf32> -> vector<8x256xf32>
    %c0_3 = arith.constant 0 : index
    %c0_4 = arith.constant 0 : index
    %3 = vector.load %arg4[%c0_3, %c0_4] : memref<1x256xf32, #tpu.memory_space<vmem>>, vector<1x256xf32>
    %4 = vector.broadcast %3 : vector<1x256xf32> to vector<8x256xf32>
    %5 = arith.addf %2, %4 : vector<8x256xf32>
    %cst_5 = arith.constant 0.000000e+00 : f32
    %6 = vector.broadcast %cst_5 : f32 to vector<8x256xf32>
    %7 = arith.maximumf %5, %6 : vector<8x256xf32>
    %c0_6 = arith.constant 0 : index
    %c0_7 = arith.constant 0 : index
    %8 = vector.load %arg5[%c0_6, %c0_7] : memref<256x64xf32, #tpu.memory_space<vmem>>, vector<256x64xf32>
    %cst_8 = arith.constant dense<0.000000e+00> : vector<8x64xf32>
    %9 = tpu.matmul %7, %8, %cst_8 {dimension_numbers = #tpu.dot_dimension_numbers<[1], [0], [0], [1], [0, 0, 1, 1], [], []>} : vector<8x256xf32>, vector<256x64xf32>, vector<8x64xf32> -> vector<8x64xf32>
    %c0_9 = arith.constant 0 : index
    %c0_10 = arith.constant 0 : index
    %10 = vector.load %arg6[%c0_9, %c0_10] : memref<1x64xf32, #tpu.memory_space<vmem>>, vector<1x64xf32>
    %11 = vector.broadcast %10 : vector<1x64xf32> to vector<8x64xf32>
    %12 = arith.addf %9, %11 : vector<8x64xf32>
    %cst_11 = arith.constant 0.000000e+00 : f32
    %13 = vector.broadcast %cst_11 : f32 to vector<8x64xf32>
    %14 = arith.maximumf %12, %13 : vector<8x64xf32>
    %c0_12 = arith.constant 0 : index
    %c0_13 = arith.constant 0 : index
    %15 = vector.load %arg7[%c0_12, %c0_13] : memref<64x256xf32, #tpu.memory_space<vmem>>, vector<64x256xf32>
    %cst_14 = arith.constant dense<0.000000e+00> : vector<8x256xf32>
    %16 = tpu.matmul %14, %15, %cst_14 {dimension_numbers = #tpu.dot_dimension_numbers<[1], [0], [0], [1], [0, 0, 1, 1], [], []>} : vector<8x64xf32>, vector<64x256xf32>, vector<8x256xf32> -> vector<8x256xf32>
    %c0_15 = arith.constant 0 : index
    %c0_16 = arith.constant 0 : index
    %17 = vector.load %arg8[%c0_15, %c0_16] : memref<1x256xf32, #tpu.memory_space<vmem>>, vector<1x256xf32>
    %18 = vector.broadcast %17 : vector<1x256xf32> to vector<8x256xf32>
    %19 = arith.addf %16, %18 : vector<8x256xf32>
    %20 = math.tanh %19 : vector<8x256xf32>
    %c0_17 = arith.constant 0 : index
    %c0_18 = arith.constant 0 : index
    %21 = vector.load %arg9[%c0_17, %c0_18] : memref<256x784xf32, #tpu.memory_space<vmem>>, vector<256x784xf32>
    %cst_19 = arith.constant dense<0.000000e+00> : vector<8x784xf32>
    %22 = tpu.matmul %20, %21, %cst_19 {dimension_numbers = #tpu.dot_dimension_numbers<[1], [0], [0], [1], [0, 0, 1, 1], [], []>} : vector<8x256xf32>, vector<256x784xf32>, vector<8x784xf32> -> vector<8x784xf32>
    %c0_20 = arith.constant 0 : index
    %c0_21 = arith.constant 0 : index
    %23 = vector.load %arg10[%c0_20, %c0_21] : memref<1x784xf32, #tpu.memory_space<vmem>>, vector<1x784xf32>
    %24 = vector.broadcast %23 : vector<1x784xf32> to vector<8x784xf32>
    %25 = arith.addf %22, %24 : vector<8x784xf32>
    %26 = arith.negf %25 : vector<8x784xf32>
    %27 = math.exp %26 : vector<8x784xf32>
    %cst_22 = arith.constant 1.000000e+00 : f32
    %28 = vector.broadcast %cst_22 : f32 to vector<8x784xf32>
    %29 = arith.addf %28, %27 : vector<8x784xf32>
    %30 = arith.divf %28, %29 : vector<8x784xf32>
    %c0_23 = arith.constant 0 : index
    %c0_24 = arith.constant 0 : index
    %31 = vector.load %arg12[%c0_23, %c0_24] : memref<8x784xf32, #tpu.memory_space<vmem>>, vector<8x784xf32>
    tpu.vector_store %arg12[%c0_23, %c0_24], %30 {strides = array<i32>} : memref<8x784xf32, #tpu.memory_space<vmem>>, vector<8x784xf32>,
    %cst_25 = arith.constant 0.000000e+00 : f32
    %32 = vector.broadcast %cst_25 : f32 to vector<8x784xf32>
    %33 = arith.minimumf %25, %32 : vector<8x784xf32>
    %34 = math.absf %25 : vector<8x784xf32>
    %cst_26 = arith.constant 0.000000e+00 : f32
    %35 = vector.broadcast %cst_26 : f32 to vector<8x784xf32>
    %36 = arith.subf %35, %34 : vector<8x784xf32>
    %37 = math.exp %36 : vector<8x784xf32>
    %38 = math.log1p %37 : vector<8x784xf32>
    %39 = arith.subf %33, %38 : vector<8x784xf32>
    %cst_27 = arith.constant 0.000000e+00 : f32
    %40 = vector.broadcast %cst_27 : f32 to vector<8x784xf32>
    %c0_28 = arith.constant 0 : index
    %c0_29 = arith.constant 0 : index
    %c0_30 = arith.constant 0 : index
    %41 = vector.load %arg2[%c0_28, %c0_29, %c0_30] : memref<3x8x784xf32, #tpu.memory_space<vmem>>, vector<1x8x784xf32>
    %42 = vector.shape_cast %41 : vector<1x8x784xf32> to vector<8x784xf32>
    %43 = arith.addf %39, %42 : vector<8x784xf32>
    %cst_31 = arith.constant 1.000000e+01 : f32
    %44 = vector.broadcast %cst_31 : f32 to vector<8x784xf32>
    %45 = arith.mulf %43, %44 : vector<8x784xf32>
    %cst_32 = arith.constant dense<0xFF800000> : vector<8xf32>
    %46 = vector.multi_reduction <maximumf>, %45, %cst_32 [1] : vector<8x784xf32> to vector<8xf32>
    %47 = vector.shape_cast %46 : vector<8xf32> to vector<8x1xf32>
    %48 = vector.broadcast %47 : vector<8x1xf32> to vector<8x784xf32>
    %49 = arith.subf %45, %48 : vector<8x784xf32>
    %50 = math.exp %49 : vector<8x784xf32>
    %cst_33 = arith.constant dense<0.000000e+00> : vector<8xf32>
    %51 = vector.multi_reduction <add>, %50, %cst_33 [1] : vector<8x784xf32> to vector<8xf32>
    %52 = vector.shape_cast %51 : vector<8xf32> to vector<8x1xf32>
    %53 = vector.broadcast %52 : vector<8x1xf32> to vector<8x784xf32>
    %54 = arith.divf %50, %53 : vector<8x784xf32>
    %55 = arith.maximumf %40, %54 : vector<8x784xf32>
    %c1 = arith.constant 1 : index
    %c0_34 = arith.constant 0 : index
    %c0_35 = arith.constant 0 : index
    %56 = vector.load %arg2[%c1, %c0_34, %c0_35] : memref<3x8x784xf32, #tpu.memory_space<vmem>>, vector<1x8x784xf32>
    %57 = vector.shape_cast %56 : vector<1x8x784xf32> to vector<8x784xf32>
    %58 = arith.addf %39, %57 : vector<8x784xf32>
    %cst_36 = arith.constant 1.000000e+01 : f32
    %59 = vector.broadcast %cst_36 : f32 to vector<8x784xf32>
    %60 = arith.mulf %58, %59 : vector<8x784xf32>
    %cst_37 = arith.constant dense<0xFF800000> : vector<8xf32>
    %61 = vector.multi_reduction <maximumf>, %60, %cst_37 [1] : vector<8x784xf32> to vector<8xf32>
    %62 = vector.shape_cast %61 : vector<8xf32> to vector<8x1xf32>
    %63 = vector.broadcast %62 : vector<8x1xf32> to vector<8x784xf32>
    %64 = arith.subf %60, %63 : vector<8x784xf32>
    %65 = math.exp %64 : vector<8x784xf32>
    %cst_38 = arith.constant dense<0.000000e+00> : vector<8xf32>
    %66 = vector.multi_reduction <add>, %65, %cst_38 [1] : vector<8x784xf32> to vector<8xf32>
    %67 = vector.shape_cast %66 : vector<8xf32> to vector<8x1xf32>
    %68 = vector.broadcast %67 : vector<8x1xf32> to vector<8x784xf32>
    %69 = arith.divf %65, %68 : vector<8x784xf32>
    %70 = arith.maximumf %55, %69 : vector<8x784xf32>
    %c2 = arith.constant 2 : index
    %c0_39 = arith.constant 0 : index
    %c0_40 = arith.constant 0 : index
    %71 = vector.load %arg2[%c2, %c0_39, %c0_40] : memref<3x8x784xf32, #tpu.memory_space<vmem>>, vector<1x8x784xf32>
    %72 = vector.shape_cast %71 : vector<1x8x784xf32> to vector<8x784xf32>
    %73 = arith.addf %39, %72 : vector<8x784xf32>
    %cst_41 = arith.constant 1.000000e+01 : f32
    %74 = vector.broadcast %cst_41 : f32 to vector<8x784xf32>
    %75 = arith.mulf %73, %74 : vector<8x784xf32>
    %cst_42 = arith.constant dense<0xFF800000> : vector<8xf32>
    %76 = vector.multi_reduction <maximumf>, %75, %cst_42 [1] : vector<8x784xf32> to vector<8xf32>
    %77 = vector.shape_cast %76 : vector<8xf32> to vector<8x1xf32>
    %78 = vector.broadcast %77 : vector<8x1xf32> to vector<8x784xf32>
    %79 = arith.subf %75, %78 : vector<8x784xf32>
    %80 = math.exp %79 : vector<8x784xf32>
    %cst_43 = arith.constant dense<0.000000e+00> : vector<8xf32>
    %81 = vector.multi_reduction <add>, %80, %cst_43 [1] : vector<8x784xf32> to vector<8xf32>
    %82 = vector.shape_cast %81 : vector<8xf32> to vector<8x1xf32>
    %83 = vector.broadcast %82 : vector<8x1xf32> to vector<8x784xf32>
    %84 = arith.divf %80, %83 : vector<8x784xf32>
    %85 = arith.maximumf %70, %84 : vector<8x784xf32>
    %86 = arith.mulf %0, %85 : vector<8x784xf32>
    %c0_44 = arith.constant 0 : index
    %c0_45 = arith.constant 0 : index
    %87 = vector.load %arg11[%c0_44, %c0_45] : memref<8x784xf32, #tpu.memory_space<vmem>>, vector<8x784xf32>
    tpu.vector_store %arg11[%c0_44, %c0_45], %86 {strides = array<i32>} : memref<8x784xf32, #tpu.memory_space<vmem>>, vector<8x784xf32>,
    return
  }
  func.func @transform_0(%arg0: i32) -> (i32, i32) {
    %c0_i32 = arith.constant 0 : i32
    %c0_i32_0 = arith.constant 0 : i32
    return %arg0, %c0_i32 : i32, i32
  }
  func.func @transform_1(%arg0: i32) -> (i32, i32, i32) {
    %c0_i32 = arith.constant 0 : i32
    %c0_i32_0 = arith.constant 0 : i32
    %c0_i32_1 = arith.constant 0 : i32
    return %c0_i32, %arg0, %c0_i32_0 : i32, i32, i32
  }
  func.func @transform_2(%arg0: i32) -> (i32, i32) {
    %c0_i32 = arith.constant 0 : i32
    %c0_i32_0 = arith.constant 0 : i32
    %c0_i32_1 = arith.constant 0 : i32
    return %c0_i32, %c0_i32_0 : i32, i32
  }
  func.func @transform_3(%arg0: i32) -> (i32, i32) {
    %c0_i32 = arith.constant 0 : i32
    %c0_i32_0 = arith.constant 0 : i32
    %c0_i32_1 = arith.constant 0 : i32
    return %c0_i32, %c0_i32_0 : i32, i32
  }
  func.func @transform_4(%arg0: i32) -> (i32, i32) {
    %c0_i32 = arith.constant 0 : i32
    %c0_i32_0 = arith.constant 0 : i32
    %c0_i32_1 = arith.constant 0 : i32
    return %c0_i32, %c0_i32_0 : i32, i32
  }
  func.func @transform_5(%arg0: i32) -> (i32, i32) {
    %c0_i32 = arith.constant 0 : i32
    %c0_i32_0 = arith.constant 0 : i32
    %c0_i32_1 = arith.constant 0 : i32
    return %c0_i32, %c0_i32_0 : i32, i32
  }
  func.func @transform_6(%arg0: i32) -> (i32, i32) {
    %c0_i32 = arith.constant 0 : i32
    %c0_i32_0 = arith.constant 0 : i32
    %c0_i32_1 = arith.constant 0 : i32
    return %c0_i32, %c0_i32_0 : i32, i32
  }
  func.func @transform_7(%arg0: i32) -> (i32, i32) {
    %c0_i32 = arith.constant 0 : i32
    %c0_i32_0 = arith.constant 0 : i32
    %c0_i32_1 = arith.constant 0 : i32
    return %c0_i32, %c0_i32_0 : i32, i32
  }
  func.func @transform_8(%arg0: i32) -> (i32, i32) {
    %c0_i32 = arith.constant 0 : i32
    %c0_i32_0 = arith.constant 0 : i32
    %c0_i32_1 = arith.constant 0 : i32
    return %c0_i32, %c0_i32_0 : i32, i32
  }
  func.func @transform_9(%arg0: i32) -> (i32, i32) {
    %c0_i32 = arith.constant 0 : i32
    %c0_i32_0 = arith.constant 0 : i32
    %c0_i32_1 = arith.constant 0 : i32
    return %c0_i32, %c0_i32_0 : i32, i32
  }
  func.func @transform_10(%arg0: i32) -> (i32, i32) {
    %c0_i32 = arith.constant 0 : i32
    %c0_i32_0 = arith.constant 0 : i32
    return %arg0, %c0_i32 : i32, i32
  }
  func.func @transform_11(%arg0: i32) -> (i32, i32) {
    %c0_i32 = arith.constant 0 : i32
    %c0_i32_0 = arith.constant 0 : i32
    return %arg0, %c0_i32 : i32, i32
  }
}

</mosaic_0001>

<llo_original>
// kernel: explainer_mnist_forward.1
$region0: #{explainer_mnist_forward.1}
  #allocation0 [shape = 'u32[]', space=smem, size = 0x4, offset = 0x4, fixed_abs, tag = 'smem constant byte address 0x4 - core index']
  #allocation1 [shape = 'u32[72,128]{1,0:T(1,128)}', space=vmem, size = 0x9000, scoped, tag = 'internal scratch']
  %s0 = inlined_call_operand.vmem [shape: f32[8,784], index: 0, kind: input, shape index: {}]
  %s1 = inlined_call_operand.vmem [shape: f32[3,8,784], index: 1, kind: input, shape index: {}]
  %s2 = inlined_call_operand.vmem [shape: f32[784,256], index: 2, kind: input, shape index: {}]
  %s3 = inlined_call_operand.vmem [shape: f32[1,256], index: 3, kind: input, shape index: {}]
  %s4 = inlined_call_operand.vmem [shape: f32[256,64], index: 4, kind: input, shape index: {}]
  %s5 = inlined_call_operand.vmem [shape: f32[1,64], index: 5, kind: input, shape index: {}]
  %s6 = inlined_call_operand.vmem [shape: f32[64,256], index: 6, kind: input, shape index: {}]
  %s7 = inlined_call_operand.vmem [shape: f32[1,256], index: 7, kind: input, shape index: {}]
  %s8 = inlined_call_operand.vmem [shape: f32[256,784], index: 8, kind: input, shape index: {}]
  %s9 = inlined_call_operand.vmem [shape: f32[1,784], index: 9, kind: input, shape index: {}]
  %s10 = inlined_call_operand.vmem [shape: f32[8,784], index: 10, kind: output, shape index: {0}]
  %s11 = inlined_call_operand.hbm [shape: f32[8,784], index: 11, kind: output, shape index: {1}]
  %12 = xla_tuple %s10, %s11
  %s13 = sld [smem:[#allocation0]]
  $region58: #{explainer_mnist_forward.1} parent=0
    _
  %s15 = ssub.s32 1, %s13
  %s16 = scalar_select 0, %s15, %s13
  $region1: #{explainer_mnist_forward.1} parent=0
    #allocation2 [shape = 'u8[28672]{0}', space=vmem, size = 0x7000, scoped, tag = 'output window, operand 1, single buffered']
    #allocation3 [shape = 's32[1]{0}', space=sflag, size = 0x4, scoped, tag = 'scoped memory for explainer_mnist_forward.1']
    %17 = vsyncpa [#allocation3], 0
    // Predicated region
    $region2: #{explainer_mnist_forward.1} parent=1 // pred_check
      _
    $region3: #{explainer_mnist_forward.1} parent=1 // pred_check_branch
      %19 = sbr.rel (0) target = $region5
    $region4: #{explainer_mnist_forward.1} parent=1 // pred_region
      _
    $region5: #{explainer_mnist_forward.1} parent=1 // pred_fallthru
      _
    // Predicated region
    $region6: #{explainer_mnist_forward.1} parent=1 // pred_check
      _
    $region7: #{explainer_mnist_forward.1} parent=1 // pred_check_branch
      %21 = sbr.rel (0) target = $region9
    $region8: #{explainer_mnist_forward.1} parent=1 // pred_region
      _
    $region9: #{explainer_mnist_forward.1} parent=1 // pred_fallthru
      _
    // Predicated region
    $region10: #{explainer_mnist_forward.1} parent=1 // pred_check
      _
    $region11: #{explainer_mnist_forward.1} parent=1 // pred_check_branch
      %23 = sbr.rel (0) target = $region13
    $region12: #{explainer_mnist_forward.1} parent=1 // pred_region
      _
    $region13: #{explainer_mnist_forward.1} parent=1 // pred_fallthru
      _
    // Predicated region
    $region14: #{explainer_mnist_forward.1} parent=1 // pred_check
      _
    $region15: #{explainer_mnist_forward.1} parent=1 // pred_check_branch
      %25 = sbr.rel (0) target = $region17
    $region16: #{explainer_mnist_forward.1} parent=1 // pred_region
      _
    $region17: #{explainer_mnist_forward.1} parent=1 // pred_fallthru
      _
    // Predicated region
    $region18: #{explainer_mnist_forward.1} parent=1 // pred_check
      _
    $region19: #{explainer_mnist_forward.1} parent=1 // pred_check_branch
      %27 = sbr.rel (0) target = $region21
    $region20: #{explainer_mnist_forward.1} parent=1 // pred_region
      _
    $region21: #{explainer_mnist_forward.1} parent=1 // pred_fallthru
      _
    // Predicated region
    $region22: #{explainer_mnist_forward.1} parent=1 // pred_check
      _
    $region23: #{explainer_mnist_forward.1} parent=1 // pred_check_branch
      %29 = sbr.rel (0) target = $region25
    $region24: #{explainer_mnist_forward.1} parent=1 // pred_region
      _
    $region25: #{explainer_mnist_forward.1} parent=1 // pred_fallthru
      _
    // Predicated region
    $region26: #{explainer_mnist_forward.1} parent=1 // pred_check
      _
    $region27: #{explainer_mnist_forward.1} parent=1 // pred_check_branch
      %31 = sbr.rel (0) target = $region29
    $region28: #{explainer_mnist_forward.1} parent=1 // pred_region
      _
    $region29: #{explainer_mnist_forward.1} parent=1 // pred_fallthru
      _
    // Predicated region
    $region30: #{explainer_mnist_forward.1} parent=1 // pred_check
      _
    $region31: #{explainer_mnist_forward.1} parent=1 // pred_check_branch
      %33 = sbr.rel (0) target = $region33
    $region32: #{explainer_mnist_forward.1} parent=1 // pred_region
      _
    $region33: #{explainer_mnist_forward.1} parent=1 // pred_fallthru
      _
    // Predicated region
    $region34: #{explainer_mnist_forward.1} parent=1 // pred_check
      _
    $region35: #{explainer_mnist_forward.1} parent=1 // pred_check_branch
      %35 = sbr.rel (0) target = $region37
    $region36: #{explainer_mnist_forward.1} parent=1 // pred_region
      _
    $region37: #{explainer_mnist_forward.1} parent=1 // pred_fallthru
      _
    // Predicated region
    $region38: #{explainer_mnist_forward.1} parent=1 // pred_check
      _
    $region39: #{explainer_mnist_forward.1} parent=1 // pred_check_branch
      %37 = sbr.rel (0) target = $region41
    $region40: #{explainer_mnist_forward.1} parent=1 // pred_region
      _
    $region41: #{explainer_mnist_forward.1} parent=1 // pred_fallthru
      _
    %v38 = vld [vmem:[%s0] sm:$0xff]
    %v39 = vld [vmem:[%s0 + $0x8] sm:$0xff]
    %v40 = vld [vmem:[%s0 + $0x10] sm:$0xff]
    %v41 = vld [vmem:[%s0 + $0x18] sm:$0xff]
    %v42 = vld [vmem:[%s0 + $0x20] sm:$0xff]
    %v43 = vld [vmem:[%s0 + $0x28] sm:$0xff]
    %v44 = vld [vmem:[%s0 + $0x30] sm:$0xff]
    %v45 = vld [vmem:[%s2] sm:$0xff]
    %v46 = vld [vmem:[%s2 + $0x8] sm:$0xff]
    %v47 = vld [vmem:[%s2 + $0x10] sm:$0xff]
    %v48 = vld [vmem:[%s2 + $0x18] sm:$0xff]
    %v49 = vld [vmem:[%s2 + $0x20] sm:$0xff]
    %v50 = vld [vmem:[%s2 + $0x28] sm:$0xff]
    %v51 = vld [vmem:[%s2 + $0x30] sm:$0xff]
    %v52 = vld [vmem:[%s2 + $0x38] sm:$0xff]
    %v53 = vld [vmem:[%s2 + $0x40] sm:$0xff]
    %v54 = vld [vmem:[%s2 + $0x48] sm:$0xff]
    %v55 = vld [vmem:[%s2 + $0x50] sm:$0xff]
    %v56 = vld [vmem:[%s2 + $0x58] sm:$0xff]
    %v57 = vld [vmem:[%s2 + $0x60] sm:$0xff]
    %v58 = vld [vmem:[%s2 + $0x68] sm:$0xff]
    %v59 = vld [vmem:[%s2 + $0x70] sm:$0xff]
    %v60 = vld [vmem:[%s2 + $0x78] sm:$0xff]
    %v61 = vld [vmem:[%s2 + $0x80] sm:$0xff]
    %v62 = vld [vmem:[%s2 + $0x88] sm:$0xff]
    %v63 = vld [vmem:[%s2 + $0x90] sm:$0xff]
    %v64 = vld [vmem:[%s2 + $0x98] sm:$0xff]
    %v65 = vld [vmem:[%s2 + $0xa0] sm:$0xff]
    %v66 = vld [vmem:[%s2 + $0xa8] sm:$0xff]
    %v67 = vld [vmem:[%s2 + $0xb0] sm:$0xff]
    %v68 = vld [vmem:[%s2 + $0xb8] sm:$0xff]
    %v69 = vld [vmem:[%s2 + $0xc0] sm:$0xff]
    %v70 = vld [vmem:[%s2 + $0xc8] sm:$0xff]
    %v71 = vld [vmem:[%s2 + $0xd0] sm:$0xff]
    %v72 = vld [vmem:[%s2 + $0xd8] sm:$0xff]
    %v73 = vld [vmem:[%s2 + $0xe0] sm:$0xff]
    %v74 = vld [vmem:[%s2 + $0xe8] sm:$0xff]
    %v75 = vld [vmem:[%s2 + $0xf0] sm:$0xff]
    %v76 = vld [vmem:[%s2 + $0xf8] sm:$0xff]
    %v77 = vld [vmem:[%s2 + $0x100] sm:$0xff]
    %v78 = vld [vmem:[%s2 + $0x108] sm:$0xff]
    %v79 = vld [vmem:[%s2 + $0x110] sm:$0xff]
    %v80 = vld [vmem:[%s2 + $0x118] sm:$0xff]
    %v81 = vld [vmem:[%s2 + $0x120] sm:$0xff]
    %v82 = vld [vmem:[%s2 + $0x128] sm:$0xff]
    %v83 = vld [vmem:[%s2 + $0x130] sm:$0xff]
    %v84 = vld [vmem:[%s2 + $0x138] sm:$0xff]
    %v85 = vld [vmem:[%s2 + $0x140] sm:$0xff]
    %v86 = vld [vmem:[%s2 + $0x148] sm:$0xff]
    %v87 = vld [vmem:[%s2 + $0x150] sm:$0xff]
    %v88 = vld [vmem:[%s2 + $0x158] sm:$0xff]
    %v89 = vld [vmem:[%s2 + $0x160] sm:$0xff]
    %v90 = vld [vmem:[%s2 + $0x168] sm:$0xff]
    %v91 = vld [vmem:[%s2 + $0x170] sm:$0xff]
    %v92 = vld [vmem:[%s2 + $0x178] sm:$0xff]
    %v93 = vld [vmem:[%s2 + $0x180] sm:$0xff]
    %v94 = vld [vmem:[%s2 + $0x188] sm:$0xff]
    %v95 = vld [vmem:[%s2 + $0x190] sm:$0xff]
    %v96 = vld [vmem:[%s2 + $0x198] sm:$0xff]
    %v97 = vld [vmem:[%s2 + $0x1a0] sm:$0xff]
    %v98 = vld [vmem:[%s2 + $0x1a8] sm:$0xff]
    %v99 = vld [vmem:[%s2 + $0x1b0] sm:$0xff]
    %v100 = vld [vmem:[%s2 + $0x1b8] sm:$0xff]
    %v101 = vld [vmem:[%s2 + $0x1c0] sm:$0xff]
    %v102 = vld [vmem:[%s2 + $0x1c8] sm:$0xff]
    %v103 = vld [vmem:[%s2 + $0x1d0] sm:$0xff]
    %v104 = vld [vmem:[%s2 + $0x1d8] sm:$0xff]
    %v105 = vld [vmem:[%s2 + $0x1e0] sm:$0xff]
    %v106 = vld [vmem:[%s2 + $0x1e8] sm:$0xff]
    %v107 = vld [vmem:[%s2 + $0x1f0] sm:$0xff]
    %v108 = vld [vmem:[%s2 + $0x1f8] sm:$0xff]
    %v109 = vld [vmem:[%s2 + $0x200] sm:$0xff]
    %v110 = vld [vmem:[%s2 + $0x208] sm:$0xff]
    %v111 = vld [vmem:[%s2 + $0x210] sm:$0xff]
    %v112 = vld [vmem:[%s2 + $0x218] sm:$0xff]
    %v113 = vld [vmem:[%s2 + $0x220] sm:$0xff]
    %v114 = vld [vmem:[%s2 + $0x228] sm:$0xff]
    %v115 = vld [vmem:[%s2 + $0x230] sm:$0xff]
    %v116 = vld [vmem:[%s2 + $0x238] sm:$0xff]
    %v117 = vld [vmem:[%s2 + $0x240] sm:$0xff]
    %v118 = vld [vmem:[%s2 + $0x248] sm:$0xff]
    %v119 = vld [vmem:[%s2 + $0x250] sm:$0xff]
    %v120 = vld [vmem:[%s2 + $0x258] sm:$0xff]
    %v121 = vld [vmem:[%s2 + $0x260] sm:$0xff]
    %v122 = vld [vmem:[%s2 + $0x268] sm:$0xff]
    %v123 = vld [vmem:[%s2 + $0x270] sm:$0xff]
    %v124 = vld [vmem:[%s2 + $0x278] sm:$0xff]
    %v125 = vld [vmem:[%s2 + $0x280] sm:$0xff]
    %v126 = vld [vmem:[%s2 + $0x288] sm:$0xff]
    %v127 = vld [vmem:[%s2 + $0x290] sm:$0xff]
    %v128 = vld [vmem:[%s2 + $0x298] sm:$0xff]
    %v129 = vld [vmem:[%s2 + $0x2a0] sm:$0xff]
    %v130 = vld [vmem:[%s2 + $0x2a8] sm:$0xff]
    %v131 = vld [vmem:[%s2 + $0x2b0] sm:$0xff]
    %v132 = vld [vmem:[%s2 + $0x2b8] sm:$0xff]
    %v133 = vld [vmem:[%s2 + $0x2c0] sm:$0xff]
    %v134 = vld [vmem:[%s2 + $0x2c8] sm:$0xff]
    %v135 = vld [vmem:[%s2 + $0x2d0] sm:$0xff]
    %v136 = vld [vmem:[%s2 + $0x2d8] sm:$0xff]
    %v137 = vld [vmem:[%s2 + $0x2e0] sm:$0xff]
    %v138 = vld [vmem:[%s2 + $0x2e8] sm:$0xff]
    %v139 = vld [vmem:[%s2 + $0x2f0] sm:$0xff]
    %v140 = vld [vmem:[%s2 + $0x2f8] sm:$0xff]
    %v141 = vld [vmem:[%s2 + $0x300] sm:$0xff]
    %v142 = vld [vmem:[%s2 + $0x308] sm:$0xff]
    %v143 = vld [vmem:[%s2 + $0x310] sm:$0xff]
    %v144 = vld [vmem:[%s2 + $0x318] sm:$0xff]
    %v145 = vld [vmem:[%s2 + $0x320] sm:$0xff]
    %v146 = vld [vmem:[%s2 + $0x328] sm:$0xff]
    %v147 = vld [vmem:[%s2 + $0x330] sm:$0xff]
    %v148 = vld [vmem:[%s2 + $0x338] sm:$0xff]
    %v149 = vld [vmem:[%s2 + $0x340] sm:$0xff]
    %v150 = vld [vmem:[%s2 + $0x348] sm:$0xff]
    %v151 = vld [vmem:[%s2 + $0x350] sm:$0xff]
    %v152 = vld [vmem:[%s2 + $0x358] sm:$0xff]
    %v153 = vld [vmem:[%s2 + $0x360] sm:$0xff]
    %v154 = vld [vmem:[%s2 + $0x368] sm:$0xff]
    %v155 = vld [vmem:[%s2 + $0x370] sm:$0xff]
    %v156 = vld [vmem:[%s2 + $0x378] sm:$0xff]
    %v157 = vld [vmem:[%s2 + $0x380] sm:$0xff]
    %v158 = vld [vmem:[%s2 + $0x388] sm:$0xff]
    %v159 = vld [vmem:[%s2 + $0x390] sm:$0xff]
    %v160 = vld [vmem:[%s2 + $0x398] sm:$0xff]
    %v161 = vld [vmem:[%s2 + $0x3a0] sm:$0xff]
    %v162 = vld [vmem:[%s2 + $0x3a8] sm:$0xff]
    %v163 = vld [vmem:[%s2 + $0x3b0] sm:$0xff]
    %v164 = vld [vmem:[%s2 + $0x3b8] sm:$0xff]
    %v165 = vld [vmem:[%s2 + $0x3c0] sm:$0xff]
    %v166 = vld [vmem:[%s2 + $0x3c8] sm:$0xff]
    %v167 = vld [vmem:[%s2 + $0x3d0] sm:$0xff]
    %v168 = vld [vmem:[%s2 + $0x3d8] sm:$0xff]
    %v169 = vld [vmem:[%s2 + $0x3e0] sm:$0xff]
    %v170 = vld [vmem:[%s2 + $0x3e8] sm:$0xff]
    %v171 = vld [vmem:[%s2 + $0x3f0] sm:$0xff]
    %v172 = vld [vmem:[%s2 + $0x3f8] sm:$0xff]
    %v173 = vld [vmem:[%s2 + $0x400] sm:$0xff]
    %v174 = vld [vmem:[%s2 + $0x408] sm:$0xff]
    %v175 = vld [vmem:[%s2 + $0x410] sm:$0xff]
    %v176 = vld [vmem:[%s2 + $0x418] sm:$0xff]
    %v177 = vld [vmem:[%s2 + $0x420] sm:$0xff]
    %v178 = vld [vmem:[%s2 + $0x428] sm:$0xff]
    %v179 = vld [vmem:[%s2 + $0x430] sm:$0xff]
    %v180 = vld [vmem:[%s2 + $0x438] sm:$0xff]
    %v181 = vld [vmem:[%s2 + $0x440] sm:$0xff]
    %v182 = vld [vmem:[%s2 + $0x448] sm:$0xff]
    %v183 = vld [vmem:[%s2 + $0x450] sm:$0xff]
    %v184 = vld [vmem:[%s2 + $0x458] sm:$0xff]
    %v185 = vld [vmem:[%s2 + $0x460] sm:$0xff]
    %v186 = vld [vmem:[%s2 + $0x468] sm:$0xff]
    %v187 = vld [vmem:[%s2 + $0x470] sm:$0xff]
    %v188 = vld [vmem:[%s2 + $0x478] sm:$0xff]
    %v189 = vld [vmem:[%s2 + $0x480] sm:$0xff]
    %v190 = vld [vmem:[%s2 + $0x488] sm:$0xff]
    %v191 = vld [vmem:[%s2 + $0x490] sm:$0xff]
    %v192 = vld [vmem:[%s2 + $0x498] sm:$0xff]
    %v193 = vld [vmem:[%s2 + $0x4a0] sm:$0xff]
    %v194 = vld [vmem:[%s2 + $0x4a8] sm:$0xff]
    %v195 = vld [vmem:[%s2 + $0x4b0] sm:$0xff]
    %v196 = vld [vmem:[%s2 + $0x4b8] sm:$0xff]
    %v197 = vld [vmem:[%s2 + $0x4c0] sm:$0xff]
    %v198 = vld [vmem:[%s2 + $0x4c8] sm:$0xff]
    %v199 = vld [vmem:[%s2 + $0x4d0] sm:$0xff]
    %v200 = vld [vmem:[%s2 + $0x4d8] sm:$0xff]
    %v201 = vld [vmem:[%s2 + $0x4e0] sm:$0xff]
    %v202 = vld [vmem:[%s2 + $0x4e8] sm:$0xff]
    %v203 = vld [vmem:[%s2 + $0x4f0] sm:$0xff]
    %v204 = vld [vmem:[%s2 + $0x4f8] sm:$0xff]
    %v205 = vld [vmem:[%s2 + $0x500] sm:$0xff]
    %v206 = vld [vmem:[%s2 + $0x508] sm:$0xff]
    %v207 = vld [vmem:[%s2 + $0x510] sm:$0xff]
    %v208 = vld [vmem:[%s2 + $0x518] sm:$0xff]
    %v209 = vld [vmem:[%s2 + $0x520] sm:$0xff]
    %v210 = vld [vmem:[%s2 + $0x528] sm:$0xff]
    %v211 = vld [vmem:[%s2 + $0x530] sm:$0xff]
    %v212 = vld [vmem:[%s2 + $0x538] sm:$0xff]
    %v213 = vld [vmem:[%s2 + $0x540] sm:$0xff]
    %v214 = vld [vmem:[%s2 + $0x548] sm:$0xff]
    %v215 = vld [vmem:[%s2 + $0x550] sm:$0xff]
    %v216 = vld [vmem:[%s2 + $0x558] sm:$0xff]
    %v217 = vld [vmem:[%s2 + $0x560] sm:$0xff]
    %v218 = vld [vmem:[%s2 + $0x568] sm:$0xff]
    %v219 = vld [vmem:[%s2 + $0x570] sm:$0xff]
    %v220 = vld [vmem:[%s2 + $0x578] sm:$0xff]
    %v221 = vld [vmem:[%s2 + $0x580] sm:$0xff]
    %v222 = vld [vmem:[%s2 + $0x588] sm:$0xff]
    %v223 = vld [vmem:[%s2 + $0x590] sm:$0xff]
    %v224 = vld [vmem:[%s2 + $0x598] sm:$0xff]
    %v225 = vld [vmem:[%s2 + $0x5a0] sm:$0xff]
    %v226 = vld [vmem:[%s2 + $0x5a8] sm:$0xff]
    %v227 = vld [vmem:[%s2 + $0x5b0] sm:$0xff]
    %v228 = vld [vmem:[%s2 + $0x5b8] sm:$0xff]
    %v229 = vld [vmem:[%s2 + $0x5c0] sm:$0xff]
    %v230 = vld [vmem:[%s2 + $0x5c8] sm:$0xff]
    %v231 = vld [vmem:[%s2 + $0x5d0] sm:$0xff]
    %v232 = vld [vmem:[%s2 + $0x5d8] sm:$0xff]
    %v233 = vld [vmem:[%s2 + $0x5e0] sm:$0xff]
    %v234 = vld [vmem:[%s2 + $0x5e8] sm:$0xff]
    %v235 = vld [vmem:[%s2 + $0x5f0] sm:$0xff]
    %v236 = vld [vmem:[%s2 + $0x5f8] sm:$0xff]
    %v237 = vld [vmem:[%s2 + $0x600] sm:$0xff]
    %v238 = vld [vmem:[%s2 + $0x608] sm:$0xff]
    %v239 = vld [vmem:[%s2 + $0x610] sm:$0xff]
    %v240 = vld [vmem:[%s2 + $0x618] sm:$0xff]
    %v241 = vld [vmem:[%s3] sm:$0x3]
    %v243 = vperm.slane %v241, 0
    %v244 = vperm.slane %v241, 1
    %vm247 = vcmask 130048
    %v249 = vsel %vm247, %v44, 0
    %251 = vmatpush.msra.mxu0 %v75
    %252 = vmatpush.msra.mxu0 %v73
    %253 = vmatpush.msra.mxu0 %v71
    %254 = vmatpush.msra.mxu0 %v69
    %255 = vmatpush.msra.mxu0 %v67
    %256 = vmatpush.msra.mxu0 %v65
    %257 = vmatpush.msra.mxu0 %v63
    %258 = vmatpush.msra.mxu0 %v61
    %259 = vmatpush.msra.mxu0 %v59
    %260 = vmatpush.msra.mxu0 %v57
    %261 = vmatpush.msra.mxu0 %v55
    %262 = vmatpush.msra.mxu0 %v53
    %263 = vmatpush.msra.mxu0 %v51
    %264 = vmatpush.msra.mxu0 %v49
    %265 = vmatpush.msra.mxu0 %v47
    %266 = vmatpush.msra.mxu0 %v45
    %267 = vmatmul.f32.gmra.mxu0 %v38
    %v268 = vpop.f32.mrf.mxu0
    %v269 = vadd.f32 %v243, %v268
    %270 = vdwg.mxu0
    %271 = vmatpush.msra.mxu0 %v107
    %272 = vmatpush.msra.mxu0 %v105
    %273 = vmatpush.msra.mxu0 %v103
    %274 = vmatpush.msra.mxu0 %v101
    %275 = vmatpush.msra.mxu0 %v99
    %276 = vmatpush.msra.mxu0 %v97
    %277 = vmatpush.msra.mxu0 %v95
    %278 = vmatpush.msra.mxu0 %v93
    %279 = vmatpush.msra.mxu0 %v91
    %280 = vmatpush.msra.mxu0 %v89
    %281 = vmatpush.msra.mxu0 %v87
    %282 = vmatpush.msra.mxu0 %v85
    %283 = vmatpush.msra.mxu0 %v83
    %284 = vmatpush.msra.mxu0 %v81
    %285 = vmatpush.msra.mxu0 %v79
    %286 = vmatpush.msra.mxu0 %v77
    %287 = vmatmul.f32.gmra.mxu0 %v39
    %v288 = vpop.f32.mrf.mxu0
    %v289 = vadd.f32 %v269, %v288
    %290 = vdwg.mxu0
    %291 = vmatpush.msra.mxu0 %v139
    %292 = vmatpush.msra.mxu0 %v137
    %293 = vmatpush.msra.mxu0 %v135
    %294 = vmatpush.msra.mxu0 %v133
    %295 = vmatpush.msra.mxu0 %v131
    %296 = vmatpush.msra.mxu0 %v129
    %297 = vmatpush.msra.mxu0 %v127
    %298 = vmatpush.msra.mxu0 %v125
    %299 = vmatpush.msra.mxu0 %v123
    %300 = vmatpush.msra.mxu0 %v121
    %301 = vmatpush.msra.mxu0 %v119
    %302 = vmatpush.msra.mxu0 %v117
    %303 = vmatpush.msra.mxu0 %v115
    %304 = vmatpush.msra.mxu0 %v113
    %305 = vmatpush.msra.mxu0 %v111
    %306 = vmatpush.msra.mxu0 %v109
    %307 = vmatmul.f32.gmra.mxu0 %v40
    %v308 = vpop.f32.mrf.mxu0
    %v309 = vadd.f32 %v289, %v308
    %310 = vdwg.mxu0
    %311 = vmatpush.msra.mxu0 %v171
    %312 = vmatpush.msra.mxu0 %v169
    %313 = vmatpush.msra.mxu0 %v167
    %314 = vmatpush.msra.mxu0 %v165
    %315 = vmatpush.msra.mxu0 %v163
    %316 = vmatpush.msra.mxu0 %v161
    %317 = vmatpush.msra.mxu0 %v159
    %318 = vmatpush.msra.mxu0 %v157
    %319 = vmatpush.msra.mxu0 %v155
    %320 = vmatpush.msra.mxu0 %v153
    %321 = vmatpush.msra.mxu0 %v151
    %322 = vmatpush.msra.mxu0 %v149
    %323 = vmatpush.msra.mxu0 %v147
    %324 = vmatpush.msra.mxu0 %v145
    %325 = vmatpush.msra.mxu0 %v143
    %326 = vmatpush.msra.mxu0 %v141
    %327 = vmatmul.f32.gmra.mxu0 %v41
    %v328 = vpop.f32.mrf.mxu0
    %v329 = vadd.f32 %v309, %v328
    %330 = vdwg.mxu0
    %331 = vmatpush.msra.mxu0 %v203
    %332 = vmatpush.msra.mxu0 %v201
    %333 = vmatpush.msra.mxu0 %v199
    %334 = vmatpush.msra.mxu0 %v197
    %335 = vmatpush.msra.mxu0 %v195
    %336 = vmatpush.msra.mxu0 %v193
    %337 = vmatpush.msra.mxu0 %v191
    %338 = vmatpush.msra.mxu0 %v189
    %339 = vmatpush.msra.mxu0 %v187
    %340 = vmatpush.msra.mxu0 %v185
    %341 = vmatpush.msra.mxu0 %v183
    %342 = vmatpush.msra.mxu0 %v181
    %343 = vmatpush.msra.mxu0 %v179
    %344 = vmatpush.msra.mxu0 %v177
    %345 = vmatpush.msra.mxu0 %v175
    %346 = vmatpush.msra.mxu0 %v173
    %347 = vmatmul.f32.gmra.mxu0 %v42
    %v348 = vpop.f32.mrf.mxu0
    %v349 = vadd.f32 %v329, %v348
    %350 = vdwg.mxu0
    %351 = vmatpush.msra.mxu0 %v235
    %352 = vmatpush.msra.mxu0 %v233
    %353 = vmatpush.msra.mxu0 %v231
    %354 = vmatpush.msra.mxu0 %v229
    %355 = vmatpush.msra.mxu0 %v227
    %356 = vmatpush.msra.mxu0 %v225
    %357 = vmatpush.msra.mxu0 %v223
    %358 = vmatpush.msra.mxu0 %v221
    %359 = vmatpush.msra.mxu0 %v219
    %360 = vmatpush.msra.mxu0 %v217
    %361 = vmatpush.msra.mxu0 %v215
    %362 = vmatpush.msra.mxu0 %v213
    %363 = vmatpush.msra.mxu0 %v211
    %364 = vmatpush.msra.mxu0 %v209
    %365 = vmatpush.msra.mxu0 %v207
    %366 = vmatpush.msra.mxu0 %v205
    %367 = vmatmul.f32.gmra.mxu0 %v43
    %v368 = vpop.f32.mrf.mxu0
    %v369 = vadd.f32 %v349, %v368
    %370 = vdwg.mxu0
    %371 = vmatpush.msra.mxu0 0.0
    %372 = vmatpush.msra.mxu0 0.0
    %373 = vmatpush.msra.mxu0 0.0
    %374 = vmatpush.msra.mxu0 0.0
    %375 = vmatpush.msra.mxu0 0.0
    %376 = vmatpush.msra.mxu0 0.0
    %377 = vmatpush.msra.mxu0 0.0
    %378 = vmatpush.msra.mxu0 0.0
    %379 = vmatpush.msra.mxu0 0.0
    %380 = vmatpush.msra.mxu0 0.0
    %381 = vmatpush.msra.mxu0 0.0
    %382 = vmatpush.msra.mxu0 0.0
    %383 = vmatpush.msra.mxu0 0.0
    %384 = vmatpush.msra.mxu0 0.0
    %385 = vmatpush.msra.mxu0 %v239
    %386 = vmatpush.msra.mxu0 %v237
    %387 = vmatmul.f32.gmra.mxu0 %v249
    %v388 = vpop.f32.mrf.mxu0
    %v389 = vadd.f32 %v369, %v388
    %390 = vdwg.mxu0
    %391 = vmatpush.msra.mxu0 %v76
    %392 = vmatpush.msra.mxu0 %v74
    %393 = vmatpush.msra.mxu0 %v72
    %394 = vmatpush.msra.mxu0 %v70
    %395 = vmatpush.msra.mxu0 %v68
    %396 = vmatpush.msra.mxu0 %v66
    %397 = vmatpush.msra.mxu0 %v64
    %398 = vmatpush.msra.mxu0 %v62
    %399 = vmatpush.msra.mxu0 %v60
    %400 = vmatpush.msra.mxu0 %v58
    %401 = vmatpush.msra.mxu0 %v56
    %402 = vmatpush.msra.mxu0 %v54
    %403 = vmatpush.msra.mxu0 %v52
    %404 = vmatpush.msra.mxu0 %v50
    %405 = vmatpush.msra.mxu0 %v48
    %406 = vmatpush.msra.mxu0 %v46
    %407 = vmatmul.f32.gmra.mxu0 %v38
    %v408 = vpop.f32.mrf.mxu0
    %v409 = vadd.f32 %v244, %v408
    %410 = vdwg.mxu0
    %411 = vmatpush.msra.mxu0 %v108
    %412 = vmatpush.msra.mxu0 %v106
    %413 = vmatpush.msra.mxu0 %v104
    %414 = vmatpush.msra.mxu0 %v102
    %415 = vmatpush.msra.mxu0 %v100
    %416 = vmatpush.msra.mxu0 %v98
    %417 = vmatpush.msra.mxu0 %v96
    %418 = vmatpush.msra.mxu0 %v94
    %419 = vmatpush.msra.mxu0 %v92
    %420 = vmatpush.msra.mxu0 %v90
    %421 = vmatpush.msra.mxu0 %v88
    %422 = vmatpush.msra.mxu0 %v86
    %423 = vmatpush.msra.mxu0 %v84
    %424 = vmatpush.msra.mxu0 %v82
    %425 = vmatpush.msra.mxu0 %v80
    %426 = vmatpush.msra.mxu0 %v78
    %427 = vmatmul.f32.gmra.mxu0 %v39
    %v428 = vpop.f32.mrf.mxu0
    %v429 = vadd.f32 %v409, %v428
    %430 = vdwg.mxu0
    %431 = vmatpush.msra.mxu0 %v140
    %432 = vmatpush.msra.mxu0 %v138
    %433 = vmatpush.msra.mxu0 %v136
    %434 = vmatpush.msra.mxu0 %v134
    %435 = vmatpush.msra.mxu0 %v132
    %436 = vmatpush.msra.mxu0 %v130
    %437 = vmatpush.msra.mxu0 %v128
    %438 = vmatpush.msra.mxu0 %v126
    %439 = vmatpush.msra.mxu0 %v124
    %440 = vmatpush.msra.mxu0 %v122
    %441 = vmatpush.msra.mxu0 %v120
    %442 = vmatpush.msra.mxu0 %v118
    %443 = vmatpush.msra.mxu0 %v116
    %444 = vmatpush.msra.mxu0 %v114
    %445 = vmatpush.msra.mxu0 %v112
    %446 = vmatpush.msra.mxu0 %v110
    %447 = vmatmul.f32.gmra.mxu0 %v40
    %v448 = vpop.f32.mrf.mxu0
    %v449 = vadd.f32 %v429, %v448
    %450 = vdwg.mxu0
    %451 = vmatpush.msra.mxu0 %v172
    %452 = vmatpush.msra.mxu0 %v170
    %453 = vmatpush.msra.mxu0 %v168
    %454 = vmatpush.msra.mxu0 %v166
    %455 = vmatpush.msra.mxu0 %v164
    %456 = vmatpush.msra.mxu0 %v162
    %457 = vmatpush.msra.mxu0 %v160
    %458 = vmatpush.msra.mxu0 %v158
    %459 = vmatpush.msra.mxu0 %v156
    %460 = vmatpush.msra.mxu0 %v154
    %461 = vmatpush.msra.mxu0 %v152
    %462 = vmatpush.msra.mxu0 %v150
    %463 = vmatpush.msra.mxu0 %v148
    %464 = vmatpush.msra.mxu0 %v146
    %465 = vmatpush.msra.mxu0 %v144
    %466 = vmatpush.msra.mxu0 %v142
    %467 = vmatmul.f32.gmra.mxu0 %v41
    %v468 = vpop.f32.mrf.mxu0
    %v469 = vadd.f32 %v449, %v468
    %470 = vdwg.mxu0
    %471 = vmatpush.msra.mxu0 %v204
    %472 = vmatpush.msra.mxu0 %v202
    %473 = vmatpush.msra.mxu0 %v200
    %474 = vmatpush.msra.mxu0 %v198
    %475 = vmatpush.msra.mxu0 %v196
    %476 = vmatpush.msra.mxu0 %v194
    %477 = vmatpush.msra.mxu0 %v192
    %478 = vmatpush.msra.mxu0 %v190
    %479 = vmatpush.msra.mxu0 %v188
    %480 = vmatpush.msra.mxu0 %v186
    %481 = vmatpush.msra.mxu0 %v184
    %482 = vmatpush.msra.mxu0 %v182
    %483 = vmatpush.msra.mxu0 %v180
    %484 = vmatpush.msra.mxu0 %v178
    %485 = vmatpush.msra.mxu0 %v176
    %486 = vmatpush.msra.mxu0 %v174
    %487 = vmatmul.f32.gmra.mxu0 %v42
    %v488 = vpop.f32.mrf.mxu0
    %v489 = vadd.f32 %v469, %v488
    %490 = vdwg.mxu0
    %491 = vmatpush.msra.mxu0 %v236
    %492 = vmatpush.msra.mxu0 %v234
    %493 = vmatpush.msra.mxu0 %v232
    %494 = vmatpush.msra.mxu0 %v230
    %495 = vmatpush.msra.mxu0 %v228
    %496 = vmatpush.msra.mxu0 %v226
    %497 = vmatpush.msra.mxu0 %v224
    %498 = vmatpush.msra.mxu0 %v222
    %499 = vmatpush.msra.mxu0 %v220
    %500 = vmatpush.msra.mxu0 %v218
    %501 = vmatpush.msra.mxu0 %v216
    %502 = vmatpush.msra.mxu0 %v214
    %503 = vmatpush.msra.mxu0 %v212
    %504 = vmatpush.msra.mxu0 %v210
    %505 = vmatpush.msra.mxu0 %v208
    %506 = vmatpush.msra.mxu0 %v206
    %507 = vmatmul.f32.gmra.mxu0 %v43
    %v508 = vpop.f32.mrf.mxu0
    %v509 = vadd.f32 %v489, %v508
    %510 = vdwg.mxu0
    %511 = vmatpush.msra.mxu0 0.0
    %512 = vmatpush.msra.mxu0 0.0
    %513 = vmatpush.msra.mxu0 0.0
    %514 = vmatpush.msra.mxu0 0.0
    %515 = vmatpush.msra.mxu0 0.0
    %516 = vmatpush.msra.mxu0 0.0
    %517 = vmatpush.msra.mxu0 0.0
    %518 = vmatpush.msra.mxu0 0.0
    %519 = vmatpush.msra.mxu0 0.0
    %520 = vmatpush.msra.mxu0 0.0
    %521 = vmatpush.msra.mxu0 0.0
    %522 = vmatpush.msra.mxu0 0.0
    %523 = vmatpush.msra.mxu0 0.0
    %524 = vmatpush.msra.mxu0 0.0
    %525 = vmatpush.msra.mxu0 %v240
    %526 = vmatpush.msra.mxu0 %v238
    %527 = vmatmul.f32.gmra.mxu0 %v249
    %v528 = vpop.f32.mrf.mxu0
    %v529 = vadd.f32 %v509, %v528
    %530 = vdwg.mxu0
    %v531 = vmax.f32 %v389, 0.0
    %v532 = vmax.f32 %v529, 0.0
    %v533 = vld [vmem:[%s4] sm:$0xff]
    %v534 = vld [vmem:[%s4 + $0x8] sm:$0xff]
    %v535 = vld [vmem:[%s4 + $0x10] sm:$0xff]
    %v536 = vld [vmem:[%s4 + $0x18] sm:$0xff]
    %v537 = vld [vmem:[%s4 + $0x20] sm:$0xff]
    %v538 = vld [vmem:[%s4 + $0x28] sm:$0xff]
    %v539 = vld [vmem:[%s4 + $0x30] sm:$0xff]
    %v540 = vld [vmem:[%s4 + $0x38] sm:$0xff]
    %v541 = vld [vmem:[%s4 + $0x40] sm:$0xff]
    %v542 = vld [vmem:[%s4 + $0x48] sm:$0xff]
    %v543 = vld [vmem:[%s4 + $0x50] sm:$0xff]
    %v544 = vld [vmem:[%s4 + $0x58] sm:$0xff]
    %v545 = vld [vmem:[%s4 + $0x60] sm:$0xff]
    %v546 = vld [vmem:[%s4 + $0x68] sm:$0xff]
    %v547 = vld [vmem:[%s4 + $0x70] sm:$0xff]
    %v548 = vld [vmem:[%s4 + $0x78] sm:$0xff]
    %v549 = vld [vmem:[%s4 + $0x80] sm:$0xff]
    %v550 = vld [vmem:[%s4 + $0x88] sm:$0xff]
    %v551 = vld [vmem:[%s4 + $0x90] sm:$0xff]
    %v552 = vld [vmem:[%s4 + $0x98] sm:$0xff]
    %v553 = vld [vmem:[%s4 + $0xa0] sm:$0xff]
    %v554 = vld [vmem:[%s4 + $0xa8] sm:$0xff]
    %v555 = vld [vmem:[%s4 + $0xb0] sm:$0xff]
    %v556 = vld [vmem:[%s4 + $0xb8] sm:$0xff]
    %v557 = vld [vmem:[%s4 + $0xc0] sm:$0xff]
    %v558 = vld [vmem:[%s4 + $0xc8] sm:$0xff]
    %v559 = vld [vmem:[%s4 + $0xd0] sm:$0xff]
    %v560 = vld [vmem:[%s4 + $0xd8] sm:$0xff]
    %v561 = vld [vmem:[%s4 + $0xe0] sm:$0xff]
    %v562 = vld [vmem:[%s4 + $0xe8] sm:$0xff]
    %v563 = vld [vmem:[%s4 + $0xf0] sm:$0xff]
    %v564 = vld [vmem:[%s4 + $0xf8] sm:$0xff]
    %v565 = vld [vmem:[%s5] sm:$0x1]
    %v567 = vperm.slane %v565, 0
    %569 = vmatpush.msra.mxu0 %v548
    %570 = vmatpush.msra.mxu0 %v547
    %571 = vmatpush.msra.mxu0 %v546
    %572 = vmatpush.msra.mxu0 %v545
    %573 = vmatpush.msra.mxu0 %v544
    %574 = vmatpush.msra.mxu0 %v543
    %575 = vmatpush.msra.mxu0 %v542
    %576 = vmatpush.msra.mxu0 %v541
    %577 = vmatpush.msra.mxu0 %v540
    %578 = vmatpush.msra.mxu0 %v539
    %579 = vmatpush.msra.mxu0 %v538
    %580 = vmatpush.msra.mxu0 %v537
    %581 = vmatpush.msra.mxu0 %v536
    %582 = vmatpush.msra.mxu0 %v535
    %583 = vmatpush.msra.mxu0 %v534
    %584 = vmatpush.msra.mxu0 %v533
    %585 = vmatmul.f32.gmra.mxu0 %v531
    %v586 = vpop.f32.mrf.mxu0
    %v587 = vadd.f32 %v567, %v586
    %588 = vdwg.mxu0
    %589 = vmatpush.msra.mxu0 %v564
    %590 = vmatpush.msra.mxu0 %v563
    %591 = vmatpush.msra.mxu0 %v562
    %592 = vmatpush.msra.mxu0 %v561
    %593 = vmatpush.msra.mxu0 %v560
    %594 = vmatpush.msra.mxu0 %v559
    %595 = vmatpush.msra.mxu0 %v558
    %596 = vmatpush.msra.mxu0 %v557
    %597 = vmatpush.msra.mxu0 %v556
    %598 = vmatpush.msra.mxu0 %v555
    %599 = vmatpush.msra.mxu0 %v554
    %600 = vmatpush.msra.mxu0 %v553
    %601 = vmatpush.msra.mxu0 %v552
    %602 = vmatpush.msra.mxu0 %v551
    %603 = vmatpush.msra.mxu0 %v550
    %604 = vmatpush.msra.mxu0 %v549
    %605 = vmatmul.f32.gmra.mxu0 %v532
    %v606 = vpop.f32.mrf.mxu0
    %v607 = vadd.f32 %v587, %v606
    %608 = vdwg.mxu0
    %v609 = vmax.f32 %v607, 0.0
    %v610 = vld [vmem:[%s6] sm:$0xff]
    %v611 = vld [vmem:[%s6 + $0x8] sm:$0xff]
    %v612 = vld [vmem:[%s6 + $0x10] sm:$0xff]
    %v613 = vld [vmem:[%s6 + $0x18] sm:$0xff]
    %v614 = vld [vmem:[%s6 + $0x20] sm:$0xff]
    %v615 = vld [vmem:[%s6 + $0x28] sm:$0xff]
    %v616 = vld [vmem:[%s6 + $0x30] sm:$0xff]
    %v617 = vld [vmem:[%s6 + $0x38] sm:$0xff]
    %v618 = vld [vmem:[%s6 + $0x40] sm:$0xff]
    %v619 = vld [vmem:[%s6 + $0x48] sm:$0xff]
    %v620 = vld [vmem:[%s6 + $0x50] sm:$0xff]
    %v621 = vld [vmem:[%s6 + $0x58] sm:$0xff]
    %v622 = vld [vmem:[%s6 + $0x60] sm:$0xff]
    %v623 = vld [vmem:[%s6 + $0x68] sm:$0xff]
    %v624 = vld [vmem:[%s6 + $0x70] sm:$0xff]
    %v625 = vld [vmem:[%s6 + $0x78] sm:$0xff]
    %v626 = vld [vmem:[%s7] sm:$0x3]
    %v628 = vperm.slane %v626, 0
    %v629 = vperm.slane %v626, 1
    %vm632 = vcmask 523264
    %v634 = vsel %vm632, %v609, 0
    %636 = vmatpush.msra.mxu0 0.0
    %637 = vmatpush.msra.mxu0 0.0
    %638 = vmatpush.msra.mxu0 0.0
    %639 = vmatpush.msra.mxu0 0.0
    %640 = vmatpush.msra.mxu0 0.0
    %641 = vmatpush.msra.mxu0 0.0
    %642 = vmatpush.msra.mxu0 0.0
    %643 = vmatpush.msra.mxu0 0.0
    %644 = vmatpush.msra.mxu0 %v624
    %645 = vmatpush.msra.mxu0 %v622
    %646 = vmatpush.msra.mxu0 %v620
    %647 = vmatpush.msra.mxu0 %v618
    %648 = vmatpush.msra.mxu0 %v616
    %649 = vmatpush.msra.mxu0 %v614
    %650 = vmatpush.msra.mxu0 %v612
    %651 = vmatpush.msra.mxu0 %v610
    %652 = vmatmul.f32.gmra.mxu0 %v634
    %v653 = vpop.f32.mrf.mxu0
    %v654 = vadd.f32 %v628, %v653
    %655 = vdwg.mxu0
    %656 = vmatpush.msra.mxu0 0.0
    %657 = vmatpush.msra.mxu0 0.0
    %658 = vmatpush.msra.mxu0 0.0
    %659 = vmatpush.msra.mxu0 0.0
    %660 = vmatpush.msra.mxu0 0.0
    %661 = vmatpush.msra.mxu0 0.0
    %662 = vmatpush.msra.mxu0 0.0
    %663 = vmatpush.msra.mxu0 0.0
    %664 = vmatpush.msra.mxu0 %v625
    %665 = vmatpush.msra.mxu0 %v623
    %666 = vmatpush.msra.mxu0 %v621
    %667 = vmatpush.msra.mxu0 %v619
    %668 = vmatpush.msra.mxu0 %v617
    %669 = vmatpush.msra.mxu0 %v615
    %670 = vmatpush.msra.mxu0 %v613
    %671 = vmatpush.msra.mxu0 %v611
    %672 = vmatmul.f32.gmra.mxu0 %v634
    %v673 = vpop.f32.mrf.mxu0
    %v674 = vadd.f32 %v629, %v673
    %675 = vdwg.mxu0
    %v676 = vtanh.pop %v654
    %v677 = vtanh.pop %v674
    %v678 = vld [vmem:[%s8] sm:$0xff]
    %v679 = vld [vmem:[%s8 + $0x8] sm:$0xff]
    %v680 = vld [vmem:[%s8 + $0x10] sm:$0xff]
    %v681 = vld [vmem:[%s8 + $0x18] sm:$0xff]
    %v682 = vld [vmem:[%s8 + $0x20] sm:$0xff]
    %v683 = vld [vmem:[%s8 + $0x28] sm:$0xff]
    %v684 = vld [vmem:[%s8 + $0x30] sm:$0xff]
    %v685 = vld [vmem:[%s8 + $0x38] sm:$0xff]
    %v686 = vld [vmem:[%s8 + $0x40] sm:$0xff]
    %v687 = vld [vmem:[%s8 + $0x48] sm:$0xff]
    %v688 = vld [vmem:[%s8 + $0x50] sm:$0xff]
    %v689 = vld [vmem:[%s8 + $0x58] sm:$0xff]
    %v690 = vld [vmem:[%s8 + $0x60] sm:$0xff]
    %v691 = vld [vmem:[%s8 + $0x68] sm:$0xff]
    %v692 = vld [vmem:[%s8 + $0x70] sm:$0xff]
    %v693 = vld [vmem:[%s8 + $0x78] sm:$0xff]
    %v694 = vld [vmem:[%s8 + $0x80] sm:$0xff]
    %v695 = vld [vmem:[%s8 + $0x88] sm:$0xff]
    %v696 = vld [vmem:[%s8 + $0x90] sm:$0xff]
    %v697 = vld [vmem:[%s8 + $0x98] sm:$0xff]
    %v698 = vld [vmem:[%s8 + $0xa0] sm:$0xff]
    %v699 = vld [vmem:[%s8 + $0xa8] sm:$0xff]
    %v700 = vld [vmem:[%s8 + $0xb0] sm:$0xff]
    %v701 = vld [vmem:[%s8 + $0xb8] sm:$0xff]
    %v702 = vld [vmem:[%s8 + $0xc0] sm:$0xff]
    %v703 = vld [vmem:[%s8 + $0xc8] sm:$0xff]
    %v704 = vld [vmem:[%s8 + $0xd0] sm:$0xff]
    %v705 = vld [vmem:[%s8 + $0xd8] sm:$0xff]
    %v706 = vld [vmem:[%s8 + $0xe0] sm:$0xff]
    %v707 = vld [vmem:[%s8 + $0xe8] sm:$0xff]
    %v708 = vld [vmem:[%s8 + $0xf0] sm:$0xff]
    %v709 = vld [vmem:[%s8 + $0xf8] sm:$0xff]
    %v710 = vld [vmem:[%s8 + $0x100] sm:$0xff]
    %v711 = vld [vmem:[%s8 + $0x108] sm:$0xff]
    %v712 = vld [vmem:[%s8 + $0x110] sm:$0xff]
    %v713 = vld [vmem:[%s8 + $0x118] sm:$0xff]
    %v714 = vld [vmem:[%s8 + $0x120] sm:$0xff]
    %v715 = vld [vmem:[%s8 + $0x128] sm:$0xff]
    %v716 = vld [vmem:[%s8 + $0x130] sm:$0xff]
    %v717 = vld [vmem:[%s8 + $0x138] sm:$0xff]
    %v718 = vld [vmem:[%s8 + $0x140] sm:$0xff]
    %v719 = vld [vmem:[%s8 + $0x148] sm:$0xff]
    %v720 = vld [vmem:[%s8 + $0x150] sm:$0xff]
    %v721 = vld [vmem:[%s8 + $0x158] sm:$0xff]
    %v722 = vld [vmem:[%s8 + $0x160] sm:$0xff]
    %v723 = vld [vmem:[%s8 + $0x168] sm:$0xff]
    %v724 = vld [vmem:[%s8 + $0x170] sm:$0xff]
    %v725 = vld [vmem:[%s8 + $0x178] sm:$0xff]
    %v726 = vld [vmem:[%s8 + $0x180] sm:$0xff]
    %v727 = vld [vmem:[%s8 + $0x188] sm:$0xff]
    %v728 = vld [vmem:[%s8 + $0x190] sm:$0xff]
    %v729 = vld [vmem:[%s8 + $0x198] sm:$0xff]
    %v730 = vld [vmem:[%s8 + $0x1a0] sm:$0xff]
    %v731 = vld [vmem:[%s8 + $0x1a8] sm:$0xff]
    %v732 = vld [vmem:[%s8 + $0x1b0] sm:$0xff]
    %v733 = vld [vmem:[%s8 + $0x1b8] sm:$0xff]
    %v734 = vld [vmem:[%s8 + $0x1c0] sm:$0xff]
    %v735 = vld [vmem:[%s8 + $0x1c8] sm:$0xff]
    %v736 = vld [vmem:[%s8 + $0x1d0] sm:$0xff]
    %v737 = vld [vmem:[%s8 + $0x1d8] sm:$0xff]
    %v738 = vld [vmem:[%s8 + $0x1e0] sm:$0xff]
    %v739 = vld [vmem:[%s8 + $0x1e8] sm:$0xff]
    %v740 = vld [vmem:[%s8 + $0x1f0] sm:$0xff]
    %v741 = vld [vmem:[%s8 + $0x1f8] sm:$0xff]
    %v742 = vld [vmem:[%s8 + $0x200] sm:$0xff]
    %v743 = vld [vmem:[%s8 + $0x208] sm:$0xff]
    %v744 = vld [vmem:[%s8 + $0x210] sm:$0xff]
    %v745 = vld [vmem:[%s8 + $0x218] sm:$0xff]
    %v746 = vld [vmem:[%s8 + $0x220] sm:$0xff]
    %v747 = vld [vmem:[%s8 + $0x228] sm:$0xff]
    %v748 = vld [vmem:[%s8 + $0x230] sm:$0xff]
    %v749 = vld [vmem:[%s8 + $0x238] sm:$0xff]
    %v750 = vld [vmem:[%s8 + $0x240] sm:$0xff]
    %v751 = vld [vmem:[%s8 + $0x248] sm:$0xff]
    %v752 = vld [vmem:[%s8 + $0x250] sm:$0xff]
    %v753 = vld [vmem:[%s8 + $0x258] sm:$0xff]
    %v754 = vld [vmem:[%s8 + $0x260] sm:$0xff]
    %v755 = vld [vmem:[%s8 + $0x268] sm:$0xff]
    %v756 = vld [vmem:[%s8 + $0x270] sm:$0xff]
    %v757 = vld [vmem:[%s8 + $0x278] sm:$0xff]
    %v758 = vld [vmem:[%s8 + $0x280] sm:$0xff]
    %v759 = vld [vmem:[%s8 + $0x288] sm:$0xff]
    %v760 = vld [vmem:[%s8 + $0x290] sm:$0xff]
    %v761 = vld [vmem:[%s8 + $0x298] sm:$0xff]
    %v762 = vld [vmem:[%s8 + $0x2a0] sm:$0xff]
    %v763 = vld [vmem:[%s8 + $0x2a8] sm:$0xff]
    %v764 = vld [vmem:[%s8 + $0x2b0] sm:$0xff]
    %v765 = vld [vmem:[%s8 + $0x2b8] sm:$0xff]
    %v766 = vld [vmem:[%s8 + $0x2c0] sm:$0xff]
    %v767 = vld [vmem:[%s8 + $0x2c8] sm:$0xff]
    %v768 = vld [vmem:[%s8 + $0x2d0] sm:$0xff]
    %v769 = vld [vmem:[%s8 + $0x2d8] sm:$0xff]
    %v770 = vld [vmem:[%s8 + $0x2e0] sm:$0xff]
    %v771 = vld [vmem:[%s8 + $0x2e8] sm:$0xff]
    %v772 = vld [vmem:[%s8 + $0x2f0] sm:$0xff]
    %v773 = vld [vmem:[%s8 + $0x2f8] sm:$0xff]
    %v774 = vld [vmem:[%s8 + $0x300] sm:$0xff]
    %v775 = vld [vmem:[%s8 + $0x308] sm:$0xff]
    %v776 = vld [vmem:[%s8 + $0x310] sm:$0xff]
    %v777 = vld [vmem:[%s8 + $0x318] sm:$0xff]
    %v778 = vld [vmem:[%s8 + $0x320] sm:$0xff]
    %v779 = vld [vmem:[%s8 + $0x328] sm:$0xff]
    %v780 = vld [vmem:[%s8 + $0x330] sm:$0xff]
    %v781 = vld [vmem:[%s8 + $0x338] sm:$0xff]
    %v782 = vld [vmem:[%s8 + $0x340] sm:$0xff]
    %v783 = vld [vmem:[%s8 + $0x348] sm:$0xff]
    %v784 = vld [vmem:[%s8 + $0x350] sm:$0xff]
    %v785 = vld [vmem:[%s8 + $0x358] sm:$0xff]
    %v786 = vld [vmem:[%s8 + $0x360] sm:$0xff]
    %v787 = vld [vmem:[%s8 + $0x368] sm:$0xff]
    %v788 = vld [vmem:[%s8 + $0x370] sm:$0xff]
    %v789 = vld [vmem:[%s8 + $0x378] sm:$0xff]
    %v790 = vld [vmem:[%s8 + $0x380] sm:$0xff]
    %v791 = vld [vmem:[%s8 + $0x388] sm:$0xff]
    %v792 = vld [vmem:[%s8 + $0x390] sm:$0xff]
    %v793 = vld [vmem:[%s8 + $0x398] sm:$0xff]
    %v794 = vld [vmem:[%s8 + $0x3a0] sm:$0xff]
    %v795 = vld [vmem:[%s8 + $0x3a8] sm:$0xff]
    %v796 = vld [vmem:[%s8 + $0x3b0] sm:$0xff]
    %v797 = vld [vmem:[%s8 + $0x3b8] sm:$0xff]
    %v798 = vld [vmem:[%s8 + $0x3c0] sm:$0xff]
    %v799 = vld [vmem:[%s8 + $0x3c8] sm:$0xff]
    %v800 = vld [vmem:[%s8 + $0x3d0] sm:$0xff]
    %v801 = vld [vmem:[%s8 + $0x3d8] sm:$0xff]
    %v802 = vld [vmem:[%s8 + $0x3e0] sm:$0xff]
    %v803 = vld [vmem:[%s8 + $0x3e8] sm:$0xff]
    %v804 = vld [vmem:[%s8 + $0x3f0] sm:$0xff]
    %v805 = vld [vmem:[%s8 + $0x3f8] sm:$0xff]
    %v806 = vld [vmem:[%s8 + $0x400] sm:$0xff]
    %v807 = vld [vmem:[%s8 + $0x408] sm:$0xff]
    %v808 = vld [vmem:[%s8 + $0x410] sm:$0xff]
    %v809 = vld [vmem:[%s8 + $0x418] sm:$0xff]
    %v810 = vld [vmem:[%s8 + $0x420] sm:$0xff]
    %v811 = vld [vmem:[%s8 + $0x428] sm:$0xff]
    %v812 = vld [vmem:[%s8 + $0x430] sm:$0xff]
    %v813 = vld [vmem:[%s8 + $0x438] sm:$0xff]
    %v814 = vld [vmem:[%s8 + $0x440] sm:$0xff]
    %v815 = vld [vmem:[%s8 + $0x448] sm:$0xff]
    %v816 = vld [vmem:[%s8 + $0x450] sm:$0xff]
    %v817 = vld [vmem:[%s8 + $0x458] sm:$0xff]
    %v818 = vld [vmem:[%s8 + $0x460] sm:$0xff]
    %v819 = vld [vmem:[%s8 + $0x468] sm:$0xff]
    %v820 = vld [vmem:[%s8 + $0x470] sm:$0xff]
    %v821 = vld [vmem:[%s8 + $0x478] sm:$0xff]
    %v822 = vld [vmem:[%s8 + $0x480] sm:$0xff]
    %v823 = vld [vmem:[%s8 + $0x488] sm:$0xff]
    %v824 = vld [vmem:[%s8 + $0x490] sm:$0xff]
    %v825 = vld [vmem:[%s8 + $0x498] sm:$0xff]
    %v826 = vld [vmem:[%s8 + $0x4a0] sm:$0xff]
    %v827 = vld [vmem:[%s8 + $0x4a8] sm:$0xff]
    %v828 = vld [vmem:[%s8 + $0x4b0] sm:$0xff]
    %v829 = vld [vmem:[%s8 + $0x4b8] sm:$0xff]
    %v830 = vld [vmem:[%s8 + $0x4c0] sm:$0xff]
    %v831 = vld [vmem:[%s8 + $0x4c8] sm:$0xff]
    %v832 = vld [vmem:[%s8 + $0x4d0] sm:$0xff]
    %v833 = vld [vmem:[%s8 + $0x4d8] sm:$0xff]
    %v834 = vld [vmem:[%s8 + $0x4e0] sm:$0xff]
    %v835 = vld [vmem:[%s8 + $0x4e8] sm:$0xff]
    %v836 = vld [vmem:[%s8 + $0x4f0] sm:$0xff]
    %v837 = vld [vmem:[%s8 + $0x4f8] sm:$0xff]
    %v838 = vld [vmem:[%s8 + $0x500] sm:$0xff]
    %v839 = vld [vmem:[%s8 + $0x508] sm:$0xff]
    %v840 = vld [vmem:[%s8 + $0x510] sm:$0xff]
    %v841 = vld [vmem:[%s8 + $0x518] sm:$0xff]
    %v842 = vld [vmem:[%s8 + $0x520] sm:$0xff]
    %v843 = vld [vmem:[%s8 + $0x528] sm:$0xff]
    %v844 = vld [vmem:[%s8 + $0x530] sm:$0xff]
    %v845 = vld [vmem:[%s8 + $0x538] sm:$0xff]
    %v846 = vld [vmem:[%s8 + $0x540] sm:$0xff]
    %v847 = vld [vmem:[%s8 + $0x548] sm:$0xff]
    %v848 = vld [vmem:[%s8 + $0x550] sm:$0xff]
    %v849 = vld [vmem:[%s8 + $0x558] sm:$0xff]
    %v850 = vld [vmem:[%s8 + $0x560] sm:$0xff]
    %v851 = vld [vmem:[%s8 + $0x568] sm:$0xff]
    %v852 = vld [vmem:[%s8 + $0x570] sm:$0xff]
    %v853 = vld [vmem:[%s8 + $0x578] sm:$0xff]
    %v854 = vld [vmem:[%s8 + $0x580] sm:$0xff]
    %v855 = vld [vmem:[%s8 + $0x588] sm:$0xff]
    %v856 = vld [vmem:[%s8 + $0x590] sm:$0xff]
    %v857 = vld [vmem:[%s8 + $0x598] sm:$0xff]
    %v858 = vld [vmem:[%s8 + $0x5a0] sm:$0xff]
    %v859 = vld [vmem:[%s8 + $0x5a8] sm:$0xff]
    %v860 = vld [vmem:[%s8 + $0x5b0] sm:$0xff]
    %v861 = vld [vmem:[%s8 + $0x5b8] sm:$0xff]
    %v862 = vld [vmem:[%s8 + $0x5c0] sm:$0xff]
    %v863 = vld [vmem:[%s8 + $0x5c8] sm:$0xff]
    %v864 = vld [vmem:[%s8 + $0x5d0] sm:$0xff]
    %v865 = vld [vmem:[%s8 + $0x5d8] sm:$0xff]
    %v866 = vld [vmem:[%s8 + $0x5e0] sm:$0xff]
    %v867 = vld [vmem:[%s8 + $0x5e8] sm:$0xff]
    %v868 = vld [vmem:[%s8 + $0x5f0] sm:$0xff]
    %v869 = vld [vmem:[%s8 + $0x5f8] sm:$0xff]
    %v870 = vld [vmem:[%s8 + $0x600] sm:$0xff]
    %v871 = vld [vmem:[%s8 + $0x608] sm:$0xff]
    %v872 = vld [vmem:[%s8 + $0x610] sm:$0xff]
    %v873 = vld [vmem:[%s8 + $0x618] sm:$0xff]
    %v874 = vld [vmem:[%s8 + $0x620] sm:$0xff]
    %v875 = vld [vmem:[%s8 + $0x628] sm:$0xff]
    %v876 = vld [vmem:[%s8 + $0x630] sm:$0xff]
    %v877 = vld [vmem:[%s8 + $0x638] sm:$0xff]
    %v878 = vld [vmem:[%s8 + $0x640] sm:$0xff]
    %v879 = vld [vmem:[%s8 + $0x648] sm:$0xff]
    %v880 = vld [vmem:[%s8 + $0x650] sm:$0xff]
    %v881 = vld [vmem:[%s8 + $0x658] sm:$0xff]
    %v882 = vld [vmem:[%s8 + $0x660] sm:$0xff]
    %v883 = vld [vmem:[%s8 + $0x668] sm:$0xff]
    %v884 = vld [vmem:[%s8 + $0x670] sm:$0xff]
    %v885 = vld [vmem:[%s8 + $0x678] sm:$0xff]
    %v886 = vld [vmem:[%s8 + $0x680] sm:$0xff]
    %v887 = vld [vmem:[%s8 + $0x688] sm:$0xff]
    %v888 = vld [vmem:[%s8 + $0x690] sm:$0xff]
    %v889 = vld [vmem:[%s8 + $0x698] sm:$0xff]
    %v890 = vld [vmem:[%s8 + $0x6a0] sm:$0xff]
    %v891 = vld [vmem:[%s8 + $0x6a8] sm:$0xff]
    %v892 = vld [vmem:[%s8 + $0x6b0] sm:$0xff]
    %v893 = vld [vmem:[%s8 + $0x6b8] sm:$0xff]
    %v894 = vld [vmem:[%s8 + $0x6c0] sm:$0xff]
    %v895 = vld [vmem:[%s8 + $0x6c8] sm:$0xff]
    %v896 = vld [vmem:[%s8 + $0x6d0] sm:$0xff]
    %v897 = vld [vmem:[%s8 + $0x6d8] sm:$0xff]
    %v898 = vld [vmem:[%s8 + $0x6e0] sm:$0xff]
    %v899 = vld [vmem:[%s8 + $0x6e8] sm:$0xff]
    %v900 = vld [vmem:[%s8 + $0x6f0] sm:$0xff]
    %v901 = vld [vmem:[%s8 + $0x6f8] sm:$0xff]
    %v902 = vld [vmem:[%s9] sm:$0x7f]
    %v904 = vperm.slane %v902, 0
    %v905 = vperm.slane %v902, 1
    %v906 = vperm.slane %v902, 2
    %v907 = vperm.slane %v902, 3
    %v908 = vperm.slane %v902, 4
    %v909 = vperm.slane %v902, 5
    %v910 = vperm.slane %v902, 6
    %918 = vmatpush.msra.mxu0 %v783
    %919 = vmatpush.msra.mxu0 %v776
    %920 = vmatpush.msra.mxu0 %v769
    %921 = vmatpush.msra.mxu0 %v762
    %922 = vmatpush.msra.mxu0 %v755
    %923 = vmatpush.msra.mxu0 %v748
    %924 = vmatpush.msra.mxu0 %v741
    %925 = vmatpush.msra.mxu0 %v734
    %926 = vmatpush.msra.mxu0 %v727
    %927 = vmatpush.msra.mxu0 %v720
    %928 = vmatpush.msra.mxu0 %v713
    %929 = vmatpush.msra.mxu0 %v706
    %930 = vmatpush.msra.mxu0 %v699
    %931 = vmatpush.msra.mxu0 %v692
    %932 = vmatpush.msra.mxu0 %v685
    %933 = vmatpush.msra.mxu0 %v678
    %934 = vmatmul.f32.gmra.mxu0 %v676
    %v935 = vpop.f32.mrf.mxu0
    %v936 = vadd.f32 %v904, %v935
    %937 = vdwg.mxu0
    %938 = vmatpush.msra.mxu0 %v895
    %939 = vmatpush.msra.mxu0 %v888
    %940 = vmatpush.msra.mxu0 %v881
    %941 = vmatpush.msra.mxu0 %v874
    %942 = vmatpush.msra.mxu0 %v867
    %943 = vmatpush.msra.mxu0 %v860
    %944 = vmatpush.msra.mxu0 %v853
    %945 = vmatpush.msra.mxu0 %v846
    %946 = vmatpush.msra.mxu0 %v839
    %947 = vmatpush.msra.mxu0 %v832
    %948 = vmatpush.msra.mxu0 %v825
    %949 = vmatpush.msra.mxu0 %v818
    %950 = vmatpush.msra.mxu0 %v811
    %951 = vmatpush.msra.mxu0 %v804
    %952 = vmatpush.msra.mxu0 %v797
    %953 = vmatpush.msra.mxu0 %v790
    %954 = vmatmul.f32.gmra.mxu0 %v677
    %v955 = vpop.f32.mrf.mxu0
    %v956 = vadd.f32 %v936, %v955
    %957 = vdwg.mxu0
    %958 = vmatpush.msra.mxu0 %v784
    %959 = vmatpush.msra.mxu0 %v777
    %960 = vmatpush.msra.mxu0 %v770
    %961 = vmatpush.msra.mxu0 %v763
    %962 = vmatpush.msra.mxu0 %v756
    %963 = vmatpush.msra.mxu0 %v749
    %964 = vmatpush.msra.mxu0 %v742
    %965 = vmatpush.msra.mxu0 %v735
    %966 = vmatpush.msra.mxu0 %v728
    %967 = vmatpush.msra.mxu0 %v721
    %968 = vmatpush.msra.mxu0 %v714
    %969 = vmatpush.msra.mxu0 %v707
    %970 = vmatpush.msra.mxu0 %v700
    %971 = vmatpush.msra.mxu0 %v693
    %972 = vmatpush.msra.mxu0 %v686
    %973 = vmatpush.msra.mxu0 %v679
    %974 = vmatmul.f32.gmra.mxu0 %v676
    %v975 = vpop.f32.mrf.mxu0
    %v976 = vadd.f32 %v905, %v975
    %977 = vdwg.mxu0
    %978 = vmatpush.msra.mxu0 %v896
    %979 = vmatpush.msra.mxu0 %v889
    %980 = vmatpush.msra.mxu0 %v882
    %981 = vmatpush.msra.mxu0 %v875
    %982 = vmatpush.msra.mxu0 %v868
    %983 = vmatpush.msra.mxu0 %v861
    %984 = vmatpush.msra.mxu0 %v854
    %985 = vmatpush.msra.mxu0 %v847
    %986 = vmatpush.msra.mxu0 %v840
    %987 = vmatpush.msra.mxu0 %v833
    %988 = vmatpush.msra.mxu0 %v826
    %989 = vmatpush.msra.mxu0 %v819
    %990 = vmatpush.msra.mxu0 %v812
    %991 = vmatpush.msra.mxu0 %v805
    %992 = vmatpush.msra.mxu0 %v798
    %993 = vmatpush.msra.mxu0 %v791
    %994 = vmatmul.f32.gmra.mxu0 %v677
    %v995 = vpop.f32.mrf.mxu0
    %v996 = vadd.f32 %v976, %v995
    %997 = vdwg.mxu0
    %998 = vmatpush.msra.mxu0 %v785
    %999 = vmatpush.msra.mxu0 %v778
    %1000 = vmatpush.msra.mxu0 %v771
    %1001 = vmatpush.msra.mxu0 %v764
    %1002 = vmatpush.msra.mxu0 %v757
    %1003 = vmatpush.msra.mxu0 %v750
    %1004 = vmatpush.msra.mxu0 %v743
    %1005 = vmatpush.msra.mxu0 %v736
    %1006 = vmatpush.msra.mxu0 %v729
    %1007 = vmatpush.msra.mxu0 %v722
    %1008 = vmatpush.msra.mxu0 %v715
    %1009 = vmatpush.msra.mxu0 %v708
    %1010 = vmatpush.msra.mxu0 %v701
    %1011 = vmatpush.msra.mxu0 %v694
    %1012 = vmatpush.msra.mxu0 %v687
    %1013 = vmatpush.msra.mxu0 %v680
    %1014 = vmatmul.f32.gmra.mxu0 %v676
    %v1015 = vpop.f32.mrf.mxu0
    %v1016 = vadd.f32 %v906, %v1015
    %1017 = vdwg.mxu0
    %1018 = vmatpush.msra.mxu0 %v897
    %1019 = vmatpush.msra.mxu0 %v890
    %1020 = vmatpush.msra.mxu0 %v883
    %1021 = vmatpush.msra.mxu0 %v876
    %1022 = vmatpush.msra.mxu0 %v869
    %1023 = vmatpush.msra.mxu0 %v862
    %1024 = vmatpush.msra.mxu0 %v855
    %1025 = vmatpush.msra.mxu0 %v848
    %1026 = vmatpush.msra.mxu0 %v841
    %1027 = vmatpush.msra.mxu0 %v834
    %1028 = vmatpush.msra.mxu0 %v827
    %1029 = vmatpush.msra.mxu0 %v820
    %1030 = vmatpush.msra.mxu0 %v813
    %1031 = vmatpush.msra.mxu0 %v806
    %1032 = vmatpush.msra.mxu0 %v799
    %1033 = vmatpush.msra.mxu0 %v792
    %1034 = vmatmul.f32.gmra.mxu0 %v677
    %v1035 = vpop.f32.mrf.mxu0
    %v1036 = vadd.f32 %v1016, %v1035
    %1037 = vdwg.mxu0
    %1038 = vmatpush.msra.mxu0 %v786
    %1039 = vmatpush.msra.mxu0 %v779
    %1040 = vmatpush.msra.mxu0 %v772
    %1041 = vmatpush.msra.mxu0 %v765
    %1042 = vmatpush.msra.mxu0 %v758
    %1043 = vmatpush.msra.mxu0 %v751
    %1044 = vmatpush.msra.mxu0 %v744
    %1045 = vmatpush.msra.mxu0 %v737
    %1046 = vmatpush.msra.mxu0 %v730
    %1047 = vmatpush.msra.mxu0 %v723
    %1048 = vmatpush.msra.mxu0 %v716
    %1049 = vmatpush.msra.mxu0 %v709
    %1050 = vmatpush.msra.mxu0 %v702
    %1051 = vmatpush.msra.mxu0 %v695
    %1052 = vmatpush.msra.mxu0 %v688
    %1053 = vmatpush.msra.mxu0 %v681
    %1054 = vmatmul.f32.gmra.mxu0 %v676
    %v1055 = vpop.f32.mrf.mxu0
    %v1056 = vadd.f32 %v907, %v1055
    %1057 = vdwg.mxu0
    %1058 = vmatpush.msra.mxu0 %v898
    %1059 = vmatpush.msra.mxu0 %v891
    %1060 = vmatpush.msra.mxu0 %v884
    %1061 = vmatpush.msra.mxu0 %v877
    %1062 = vmatpush.msra.mxu0 %v870
    %1063 = vmatpush.msra.mxu0 %v863
    %1064 = vmatpush.msra.mxu0 %v856
    %1065 = vmatpush.msra.mxu0 %v849
    %1066 = vmatpush.msra.mxu0 %v842
    %1067 = vmatpush.msra.mxu0 %v835
    %1068 = vmatpush.msra.mxu0 %v828
    %1069 = vmatpush.msra.mxu0 %v821
    %1070 = vmatpush.msra.mxu0 %v814
    %1071 = vmatpush.msra.mxu0 %v807
    %1072 = vmatpush.msra.mxu0 %v800
    %1073 = vmatpush.msra.mxu0 %v793
    %1074 = vmatmul.f32.gmra.mxu0 %v677
    %v1075 = vpop.f32.mrf.mxu0
    %v1076 = vadd.f32 %v1056, %v1075
    %1077 = vdwg.mxu0
    %1078 = vmatpush.msra.mxu0 %v787
    %1079 = vmatpush.msra.mxu0 %v780
    %1080 = vmatpush.msra.mxu0 %v773
    %1081 = vmatpush.msra.mxu0 %v766
    %1082 = vmatpush.msra.mxu0 %v759
    %1083 = vmatpush.msra.mxu0 %v752
    %1084 = vmatpush.msra.mxu0 %v745
    %1085 = vmatpush.msra.mxu0 %v738
    %1086 = vmatpush.msra.mxu0 %v731
    %1087 = vmatpush.msra.mxu0 %v724
    %1088 = vmatpush.msra.mxu0 %v717
    %1089 = vmatpush.msra.mxu0 %v710
    %1090 = vmatpush.msra.mxu0 %v703
    %1091 = vmatpush.msra.mxu0 %v696
    %1092 = vmatpush.msra.mxu0 %v689
    %1093 = vmatpush.msra.mxu0 %v682
    %1094 = vmatmul.f32.gmra.mxu0 %v676
    %v1095 = vpop.f32.mrf.mxu0
    %v1096 = vadd.f32 %v908, %v1095
    %1097 = vdwg.mxu0
    %1098 = vmatpush.msra.mxu0 %v899
    %1099 = vmatpush.msra.mxu0 %v892
    %1100 = vmatpush.msra.mxu0 %v885
    %1101 = vmatpush.msra.mxu0 %v878
    %1102 = vmatpush.msra.mxu0 %v871
    %1103 = vmatpush.msra.mxu0 %v864
    %1104 = vmatpush.msra.mxu0 %v857
    %1105 = vmatpush.msra.mxu0 %v850
    %1106 = vmatpush.msra.mxu0 %v843
    %1107 = vmatpush.msra.mxu0 %v836
    %1108 = vmatpush.msra.mxu0 %v829
    %1109 = vmatpush.msra.mxu0 %v822
    %1110 = vmatpush.msra.mxu0 %v815
    %1111 = vmatpush.msra.mxu0 %v808
    %1112 = vmatpush.msra.mxu0 %v801
    %1113 = vmatpush.msra.mxu0 %v794
    %1114 = vmatmul.f32.gmra.mxu0 %v677
    %v1115 = vpop.f32.mrf.mxu0
    %v1116 = vadd.f32 %v1096, %v1115
    %1117 = vdwg.mxu0
    %1118 = vmatpush.msra.mxu0 %v788
    %1119 = vmatpush.msra.mxu0 %v781
    %1120 = vmatpush.msra.mxu0 %v774
    %1121 = vmatpush.msra.mxu0 %v767
    %1122 = vmatpush.msra.mxu0 %v760
    %1123 = vmatpush.msra.mxu0 %v753
    %1124 = vmatpush.msra.mxu0 %v746
    %1125 = vmatpush.msra.mxu0 %v739
    %1126 = vmatpush.msra.mxu0 %v732
    %1127 = vmatpush.msra.mxu0 %v725
    %1128 = vmatpush.msra.mxu0 %v718
    %1129 = vmatpush.msra.mxu0 %v711
    %1130 = vmatpush.msra.mxu0 %v704
    %1131 = vmatpush.msra.mxu0 %v697
    %1132 = vmatpush.msra.mxu0 %v690
    %1133 = vmatpush.msra.mxu0 %v683
    %1134 = vmatmul.f32.gmra.mxu0 %v676
    %v1135 = vpop.f32.mrf.mxu0
    %v1136 = vadd.f32 %v909, %v1135
    %1137 = vdwg.mxu0
    %1138 = vmatpush.msra.mxu0 %v900
    %1139 = vmatpush.msra.mxu0 %v893
    %1140 = vmatpush.msra.mxu0 %v886
    %1141 = vmatpush.msra.mxu0 %v879
    %1142 = vmatpush.msra.mxu0 %v872
    %1143 = vmatpush.msra.mxu0 %v865
    %1144 = vmatpush.msra.mxu0 %v858
    %1145 = vmatpush.msra.mxu0 %v851
    %1146 = vmatpush.msra.mxu0 %v844
    %1147 = vmatpush.msra.mxu0 %v837
    %1148 = vmatpush.msra.mxu0 %v830
    %1149 = vmatpush.msra.mxu0 %v823
    %1150 = vmatpush.msra.mxu0 %v816
    %1151 = vmatpush.msra.mxu0 %v809
    %1152 = vmatpush.msra.mxu0 %v802
    %1153 = vmatpush.msra.mxu0 %v795
    %1154 = vmatmul.f32.gmra.mxu0 %v677
    %v1155 = vpop.f32.mrf.mxu0
    %v1156 = vadd.f32 %v1136, %v1155
    %1157 = vdwg.mxu0
    %1158 = vmatpush.msra.mxu0 %v789
    %1159 = vmatpush.msra.mxu0 %v782
    %1160 = vmatpush.msra.mxu0 %v775
    %1161 = vmatpush.msra.mxu0 %v768
    %1162 = vmatpush.msra.mxu0 %v761
    %1163 = vmatpush.msra.mxu0 %v754
    %1164 = vmatpush.msra.mxu0 %v747
    %1165 = vmatpush.msra.mxu0 %v740
    %1166 = vmatpush.msra.mxu0 %v733
    %1167 = vmatpush.msra.mxu0 %v726
    %1168 = vmatpush.msra.mxu0 %v719
    %1169 = vmatpush.msra.mxu0 %v712
    %1170 = vmatpush.msra.mxu0 %v705
    %1171 = vmatpush.msra.mxu0 %v698
    %1172 = vmatpush.msra.mxu0 %v691
    %1173 = vmatpush.msra.mxu0 %v684
    %1174 = vmatmul.f32.gmra.mxu0 %v676
    %v1175 = vpop.f32.mrf.mxu0
    %v1176 = vadd.f32 %v910, %v1175
    %1177 = vdwg.mxu0
    %1178 = vmatpush.msra.mxu0 %v901
    %1179 = vmatpush.msra.mxu0 %v894
    %1180 = vmatpush.msra.mxu0 %v887
    %1181 = vmatpush.msra.mxu0 %v880
    %1182 = vmatpush.msra.mxu0 %v873
    %1183 = vmatpush.msra.mxu0 %v866
    %1184 = vmatpush.msra.mxu0 %v859
    %1185 = vmatpush.msra.mxu0 %v852
    %1186 = vmatpush.msra.mxu0 %v845
    %1187 = vmatpush.msra.mxu0 %v838
    %1188 = vmatpush.msra.mxu0 %v831
    %1189 = vmatpush.msra.mxu0 %v824
    %1190 = vmatpush.msra.mxu0 %v817
    %1191 = vmatpush.msra.mxu0 %v810
    %1192 = vmatpush.msra.mxu0 %v803
    %1193 = vmatpush.msra.mxu0 %v796
    %1194 = vmatmul.f32.gmra.mxu0 %v677
    %v1195 = vpop.f32.mrf.mxu0
    %v1196 = vadd.f32 %v1176, %v1195
    %1197 = vdwg.mxu0
    %v1198 = vxor.u32 %v956, 2147483648
    %v1199 = vxor.u32 %v996, 2147483648
    %v1200 = vxor.u32 %v1036, 2147483648
    %v1201 = vxor.u32 %v1076, 2147483648
    %v1202 = vxor.u32 %v1116, 2147483648
    %v1203 = vxor.u32 %v1156, 2147483648
    %v1204 = vxor.u32 %v1196, 2147483648
    %v1205 = vmul.f32 %v1198, 1.442695
    %v1206 = vpow.pop %v1205
    %v1207 = vmul.f32 %v1199, 1.442695
    %v1208 = vpow.pop %v1207
    %v1209 = vmul.f32 %v1200, 1.442695
    %v1210 = vpow.pop %v1209
    %v1211 = vmul.f32 %v1201, 1.442695
    %v1212 = vpow.pop %v1211
    %v1213 = vmul.f32 %v1202, 1.442695
    %v1214 = vpow.pop %v1213
    %v1215 = vmul.f32 %v1203, 1.442695
    %v1216 = vpow.pop %v1215
    %v1217 = vmul.f32 %v1204, 1.442695
    %v1218 = vpow.pop %v1217
    %v1219 = vadd.f32 %v1206, 1.0
    %v1220 = vadd.f32 %v1208, 1.0
    %v1221 = vadd.f32 %v1210, 1.0
    %v1222 = vadd.f32 %v1212, 1.0
    %v1223 = vadd.f32 %v1214, 1.0
    %v1224 = vadd.f32 %v1216, 1.0
    %v1225 = vadd.f32 %v1218, 1.0
    %v1226 = vrcp.pop %v1219
    %v1227 = vmul.f32 %v1219, %v1226
    %v1228 = vsub.f32 1.0, %v1227
    %v1229 = vmul.f32 %v1226, %v1228
    %v1230 = vadd.f32 %v1226, %v1229
    %vm1231 = vweird.f32 %v1219
    %vm1232 = vweird.f32 %v1226
    %vm1233 = vmor %vm1231, %vm1232
    %v1234 = vsel %vm1233, %v1226, %v1230
    %v1235 = vand.u32 2147483647, %v1219
    %vm1236 = vcmp.eq.f32.partialorder %v1235, 8.507059e+37
    %v1237 = vand.u32 %v1219, 2147483648
    %v1238 = vor.u32 1.1754944e-38, %v1237
    %v1239 = vsel %vm1236, %v1238, %v1234
    %v1240 = vmul.f32 1.0, %v1239
    %v1241 = vrcp.pop %v1220
    %v1242 = vmul.f32 %v1220, %v1241
    %v1243 = vsub.f32 1.0, %v1242
    %v1244 = vmul.f32 %v1241, %v1243
    %v1245 = vadd.f32 %v1241, %v1244
    %vm1246 = vweird.f32 %v1220
    %vm1247 = vweird.f32 %v1241
    %vm1248 = vmor %vm1246, %vm1247
    %v1249 = vsel %vm1248, %v1241, %v1245
    %v1250 = vand.u32 2147483647, %v1220
    %vm1251 = vcmp.eq.f32.partialorder %v1250, 8.507059e+37
    %v1252 = vand.u32 %v1220, 2147483648
    %v1253 = vor.u32 1.1754944e-38, %v1252
    %v1254 = vsel %vm1251, %v1253, %v1249
    %v1255 = vmul.f32 1.0, %v1254
    %v1256 = vrcp.pop %v1221
    %v1257 = vmul.f32 %v1221, %v1256
    %v1258 = vsub.f32 1.0, %v1257
    %v1259 = vmul.f32 %v1256, %v1258
    %v1260 = vadd.f32 %v1256, %v1259
    %vm1261 = vweird.f32 %v1221
    %vm1262 = vweird.f32 %v1256
    %vm1263 = vmor %vm1261, %vm1262
    %v1264 = vsel %vm1263, %v1256, %v1260
    %v1265 = vand.u32 2147483647, %v1221
    %vm1266 = vcmp.eq.f32.partialorder %v1265, 8.507059e+37
    %v1267 = vand.u32 %v1221, 2147483648
    %v1268 = vor.u32 1.1754944e-38, %v1267
    %v1269 = vsel %vm1266, %v1268, %v1264
    %v1270 = vmul.f32 1.0, %v1269
    %v1271 = vrcp.pop %v1222
    %v1272 = vmul.f32 %v1222, %v1271
    %v1273 = vsub.f32 1.0, %v1272
    %v1274 = vmul.f32 %v1271, %v1273
    %v1275 = vadd.f32 %v1271, %v1274
    %vm1276 = vweird.f32 %v1222
    %vm1277 = vweird.f32 %v1271
    %vm1278 = vmor %vm1276, %vm1277
    %v1279 = vsel %vm1278, %v1271, %v1275
    %v1280 = vand.u32 2147483647, %v1222
    %vm1281 = vcmp.eq.f32.partialorder %v1280, 8.507059e+37
    %v1282 = vand.u32 %v1222, 2147483648
    %v1283 = vor.u32 1.1754944e-38, %v1282
    %v1284 = vsel %vm1281, %v1283, %v1279
    %v1285 = vmul.f32 1.0, %v1284
    %v1286 = vrcp.pop %v1223
    %v1287 = vmul.f32 %v1223, %v1286
    %v1288 = vsub.f32 1.0, %v1287
    %v1289 = vmul.f32 %v1286, %v1288
    %v1290 = vadd.f32 %v1286, %v1289
    %vm1291 = vweird.f32 %v1223
    %vm1292 = vweird.f32 %v1286
    %vm1293 = vmor %vm1291, %vm1292
    %v1294 = vsel %vm1293, %v1286, %v1290
    %v1295 = vand.u32 2147483647, %v1223
    %vm1296 = vcmp.eq.f32.partialorder %v1295, 8.507059e+37
    %v1297 = vand.u32 %v1223, 2147483648
    %v1298 = vor.u32 1.1754944e-38, %v1297
    %v1299 = vsel %vm1296, %v1298, %v1294
    %v1300 = vmul.f32 1.0, %v1299
    %v1301 = vrcp.pop %v1224
    %v1302 = vmul.f32 %v1224, %v1301
    %v1303 = vsub.f32 1.0, %v1302
    %v1304 = vmul.f32 %v1301, %v1303
    %v1305 = vadd.f32 %v1301, %v1304
    %vm1306 = vweird.f32 %v1224
    %vm1307 = vweird.f32 %v1301
    %vm1308 = vmor %vm1306, %vm1307
    %v1309 = vsel %vm1308, %v1301, %v1305
    %v1310 = vand.u32 2147483647, %v1224
    %vm1311 = vcmp.eq.f32.partialorder %v1310, 8.507059e+37
    %v1312 = vand.u32 %v1224, 2147483648
    %v1313 = vor.u32 1.1754944e-38, %v1312
    %v1314 = vsel %vm1311, %v1313, %v1309
    %v1315 = vmul.f32 1.0, %v1314
    %v1316 = vrcp.pop %v1225
    %v1317 = vmul.f32 %v1225, %v1316
    %v1318 = vsub.f32 1.0, %v1317
    %v1319 = vmul.f32 %v1316, %v1318
    %v1320 = vadd.f32 %v1316, %v1319
    %vm1321 = vweird.f32 %v1225
    %vm1322 = vweird.f32 %v1316
    %vm1323 = vmor %vm1321, %vm1322
    %v1324 = vsel %vm1323, %v1316, %v1320
    %v1325 = vand.u32 2147483647, %v1225
    %vm1326 = vcmp.eq.f32.partialorder %v1325, 8.507059e+37
    %v1327 = vand.u32 %v1225, 2147483648
    %v1328 = vor.u32 1.1754944e-38, %v1327
    %v1329 = vsel %vm1326, %v1328, %v1324
    %v1330 = vmul.f32 1.0, %v1329
    %1331 = vst [vmem:[#allocation2] sm:$0xff] %v1240
    %1332 = vst [vmem:[#allocation2 + $0x8] sm:$0xff] %v1255
    %1333 = vst [vmem:[#allocation2 + $0x10] sm:$0xff] %v1270
    %1334 = vst [vmem:[#allocation2 + $0x18] sm:$0xff] %v1285
    %1335 = vst [vmem:[#allocation2 + $0x20] sm:$0xff] %v1300
    %1336 = vst [vmem:[#allocation2 + $0x28] sm:$0xff] %v1315
    %1337 = vst.msk [vmem:[#allocation2 + $0x30] sm:$0xff] %vm247, %v1330
    %v1338 = vmin.f32 %v956, 0.0
    %v1339 = vmin.f32 %v996, 0.0
    %v1340 = vmin.f32 %v1036, 0.0
    %v1341 = vmin.f32 %v1076, 0.0
    %v1342 = vmin.f32 %v1116, 0.0
    %v1343 = vmin.f32 %v1156, 0.0
    %v1344 = vmin.f32 %v1196, 0.0
    %v1345 = vand.u32 2147483647, %v956
    %v1346 = vand.u32 2147483647, %v996
    %v1347 = vand.u32 2147483647, %v1036
    %v1348 = vand.u32 2147483647, %v1076
    %v1349 = vand.u32 2147483647, %v1116
    %v1350 = vand.u32 2147483647, %v1156
    %v1351 = vand.u32 2147483647, %v1196
    %v1352 = vsub.f32 0.0, %v1345
    %v1353 = vsub.f32 0.0, %v1346
    %v1354 = vsub.f32 0.0, %v1347
    %v1355 = vsub.f32 0.0, %v1348
    %v1356 = vsub.f32 0.0, %v1349
    %v1357 = vsub.f32 0.0, %v1350
    %v1358 = vsub.f32 0.0, %v1351
    %v1359 = vmul.f32 %v1352, 1.442695
    %v1360 = vpow.pop %v1359
    %v1361 = vmul.f32 %v1353, 1.442695
    %v1362 = vpow.pop %v1361
    %v1363 = vmul.f32 %v1354, 1.442695
    %v1364 = vpow.pop %v1363
    %v1365 = vmul.f32 %v1355, 1.442695
    %v1366 = vpow.pop %v1365
    %v1367 = vmul.f32 %v1356, 1.442695
    %v1368 = vpow.pop %v1367
    %v1369 = vmul.f32 %v1357, 1.442695
    %v1370 = vpow.pop %v1369
    %v1371 = vmul.f32 %v1358, 1.442695
    %v1372 = vpow.pop %v1371
    %v1373 = vadd.f32 %v1360, 1.0
    %v1374 = vlog2.pop %v1373
    %v1375 = vmul.f32 %v1374, 0.6931472
    %v1376 = vmul.f32 -0.5, %v1360
    %v1377 = vadd.f32 %v1376, 1.0
    %v1378 = vmul.f32 %v1377, %v1360
    %v1379 = vand.u32 2147483647, %v1360
    %vm1380 = vcmp.lt.f32.partialorder %v1379, 0.0004427343
    %v1381 = vsel %vm1380, %v1378, %v1375
    %v1382 = vadd.f32 %v1362, 1.0
    %v1383 = vlog2.pop %v1382
    %v1384 = vmul.f32 %v1383, 0.6931472
    %v1385 = vmul.f32 -0.5, %v1362
    %v1386 = vadd.f32 %v1385, 1.0
    %v1387 = vmul.f32 %v1386, %v1362
    %v1388 = vand.u32 2147483647, %v1362
    %vm1389 = vcmp.lt.f32.partialorder %v1388, 0.0004427343
    %v1390 = vsel %vm1389, %v1387, %v1384
    %v1391 = vadd.f32 %v1364, 1.0
    %v1392 = vlog2.pop %v1391
    %v1393 = vmul.f32 %v1392, 0.6931472
    %v1394 = vmul.f32 -0.5, %v1364
    %v1395 = vadd.f32 %v1394, 1.0
    %v1396 = vmul.f32 %v1395, %v1364
    %v1397 = vand.u32 2147483647, %v1364
    %vm1398 = vcmp.lt.f32.partialorder %v1397, 0.0004427343
    %v1399 = vsel %vm1398, %v1396, %v1393
    %v1400 = vadd.f32 %v1366, 1.0
    %v1401 = vlog2.pop %v1400
    %v1402 = vmul.f32 %v1401, 0.6931472
    %v1403 = vmul.f32 -0.5, %v1366
    %v1404 = vadd.f32 %v1403, 1.0
    %v1405 = vmul.f32 %v1404, %v1366
    %v1406 = vand.u32 2147483647, %v1366
    %vm1407 = vcmp.lt.f32.partialorder %v1406, 0.0004427343
    %v1408 = vsel %vm1407, %v1405, %v1402
    %v1409 = vadd.f32 %v1368, 1.0
    %v1410 = vlog2.pop %v1409
    %v1411 = vmul.f32 %v1410, 0.6931472
    %v1412 = vmul.f32 -0.5, %v1368
    %v1413 = vadd.f32 %v1412, 1.0
    %v1414 = vmul.f32 %v1413, %v1368
    %v1415 = vand.u32 2147483647, %v1368
    %vm1416 = vcmp.lt.f32.partialorder %v1415, 0.0004427343
    %v1417 = vsel %vm1416, %v1414, %v1411
    %v1418 = vadd.f32 %v1370, 1.0
    %v1419 = vlog2.pop %v1418
    %v1420 = vmul.f32 %v1419, 0.6931472
    %v1421 = vmul.f32 -0.5, %v1370
    %v1422 = vadd.f32 %v1421, 1.0
    %v1423 = vmul.f32 %v1422, %v1370
    %v1424 = vand.u32 2147483647, %v1370
    %vm1425 = vcmp.lt.f32.partialorder %v1424, 0.0004427343
    %v1426 = vsel %vm1425, %v1423, %v1420
    %v1427 = vadd.f32 %v1372, 1.0
    %v1428 = vlog2.pop %v1427
    %v1429 = vmul.f32 %v1428, 0.6931472
    %v1430 = vmul.f32 -0.5, %v1372
    %v1431 = vadd.f32 %v1430, 1.0
    %v1432 = vmul.f32 %v1431, %v1372
    %v1433 = vand.u32 2147483647, %v1372
    %vm1434 = vcmp.lt.f32.partialorder %v1433, 0.0004427343
    %v1435 = vsel %vm1434, %v1432, %v1429
    %v1436 = vsub.f32 %v1338, %v1381
    %v1437 = vsub.f32 %v1339, %v1390
    %v1438 = vsub.f32 %v1340, %v1399
    %v1439 = vsub.f32 %v1341, %v1408
    %v1440 = vsub.f32 %v1342, %v1417
    %v1441 = vsub.f32 %v1343, %v1426
    %v1442 = vsub.f32 %v1344, %v1435
    %v1443 = vld [vmem:[%s1] sm:$0xff]
    %v1444 = vld [vmem:[%s1 + $0x8] sm:$0xff]
    %v1445 = vld [vmem:[%s1 + $0x10] sm:$0xff]
    %v1446 = vld [vmem:[%s1 + $0x18] sm:$0xff]
    %v1447 = vld [vmem:[%s1 + $0x20] sm:$0xff]
    %v1448 = vld [vmem:[%s1 + $0x28] sm:$0xff]
    %v1449 = vld [vmem:[%s1 + $0x30] sm:$0xff]
    %v1450 = vadd.f32 %v1436, %v1443
    %v1451 = vadd.f32 %v1437, %v1444
    %v1452 = vadd.f32 %v1438, %v1445
    %v1453 = vadd.f32 %v1439, %v1446
    %v1454 = vadd.f32 %v1440, %v1447
    %v1455 = vadd.f32 %v1441, %v1448
    %v1456 = vadd.f32 %v1442, %v1449
    %v1457 = vmul.f32 %v1450, 10.0
    %v1458 = vmul.f32 %v1451, 10.0
    %v1459 = vmul.f32 %v1452, 10.0
    %v1460 = vmul.f32 %v1453, 10.0
    %v1461 = vmul.f32 %v1454, 10.0
    %v1462 = vmul.f32 %v1455, 10.0
    %v1463 = vmul.f32 %v1456, 10.0
    %v1464 = vmax.f32 %v1457, %v1461
    %v1465 = vmax.f32 %v1458, %v1462
    %v1466 = vsel %vm247, %v1463, -inf
    %v1467 = vmax.f32 %v1459, %v1466
    %v1468 = vmax.f32 %v1464, %v1465
    %v1469 = vmax.f32 %v1467, %v1460
    %v1470 = vmax.f32 %v1468, %v1469
    %1471 = vmax.xlane.f32.xlu0 %v1470
    %v1472 = vpop.xlane.xlu0 %1471
    %v1473 = vsub.f32 %v1457, %v1472
    %v1474 = vsub.f32 %v1458, %v1472
    %v1475 = vsub.f32 %v1459, %v1472
    %v1476 = vsub.f32 %v1460, %v1472
    %v1477 = vsub.f32 %v1461, %v1472
    %v1478 = vsub.f32 %v1462, %v1472
    %v1479 = vsub.f32 %v1463, %v1472
    %v1480 = vmul.f32 %v1473, 1.442695
    %v1481 = vpow.pop %v1480
    %v1482 = vmul.f32 %v1474, 1.442695
    %v1483 = vpow.pop %v1482
    %v1484 = vmul.f32 %v1475, 1.442695
    %v1485 = vpow.pop %v1484
    %v1486 = vmul.f32 %v1476, 1.442695
    %v1487 = vpow.pop %v1486
    %v1488 = vmul.f32 %v1477, 1.442695
    %v1489 = vpow.pop %v1488
    %v1490 = vmul.f32 %v1478, 1.442695
    %v1491 = vpow.pop %v1490
    %v1492 = vmul.f32 %v1479, 1.442695
    %v1493 = vpow.pop %v1492
    %v1494 = vadd.f32 %v1481, %v1483
    %v1495 = vadd.f32 %v1494, %v1485
    %v1496 = vadd.f32 %v1495, %v1487
    %v1497 = vadd.f32 %v1496, %v1489
    %v1498 = vadd.f32 %v1497, %v1491
    %v1499 = vsel %vm247, %v1493, 0.0
    %v1500 = vadd.f32 %v1498, %v1499
    %1501 = vadd.xlane.f32.xlu0 %v1500
    %v1502 = vpop.xlane.xlu0 %1501
    %v1503 = vrcp.pop %v1502
    %v1504 = vmul.f32 %v1502, %v1503
    %v1505 = vsub.f32 1.0, %v1504
    %v1506 = vmul.f32 %v1503, %v1505
    %v1507 = vadd.f32 %v1503, %v1506
    %vm1508 = vweird.f32 %v1502
    %vm1509 = vweird.f32 %v1503
    %vm1510 = vmor %vm1508, %vm1509
    %v1511 = vsel %vm1510, %v1503, %v1507
    %v1512 = vand.u32 2147483647, %v1502
    %vm1513 = vcmp.eq.f32.partialorder %v1512, 8.507059e+37
    %v1514 = vand.u32 %v1502, 2147483648
    %v1515 = vor.u32 1.1754944e-38, %v1514
    %v1516 = vsel %vm1513, %v1515, %v1511
    %v1517 = vmul.f32 %v1481, %v1516
    %v1518 = vmul.f32 %v1483, %v1516
    %v1519 = vmul.f32 %v1485, %v1516
    %v1520 = vmul.f32 %v1487, %v1516
    %v1521 = vmul.f32 %v1489, %v1516
    %v1522 = vmul.f32 %v1491, %v1516
    %v1523 = vmul.f32 %v1493, %v1516
    %v1524 = vmax.f32 %v1517, 0.0
    %v1525 = vmax.f32 %v1518, 0.0
    %v1526 = vmax.f32 %v1519, 0.0
    %v1527 = vmax.f32 %v1520, 0.0
    %v1528 = vmax.f32 %v1521, 0.0
    %v1529 = vmax.f32 %v1522, 0.0
    %v1530 = vmax.f32 %v1523, 0.0
    %s1531 = scalar_lea.vmem %s1, 56
    %v1532 = vld [vmem:[%s1531] sm:$0xff]
    %v1533 = vld [vmem:[%s1531 + $0x8] sm:$0xff]
    %v1534 = vld [vmem:[%s1531 + $0x10] sm:$0xff]
    %v1535 = vld [vmem:[%s1531 + $0x18] sm:$0xff]
    %v1536 = vld [vmem:[%s1531 + $0x20] sm:$0xff]
    %v1537 = vld [vmem:[%s1531 + $0x28] sm:$0xff]
    %v1538 = vld [vmem:[%s1531 + $0x30] sm:$0xff]
    %v1539 = vadd.f32 %v1436, %v1532
    %v1540 = vadd.f32 %v1437, %v1533
    %v1541 = vadd.f32 %v1438, %v1534
    %v1542 = vadd.f32 %v1439, %v1535
    %v1543 = vadd.f32 %v1440, %v1536
    %v1544 = vadd.f32 %v1441, %v1537
    %v1545 = vadd.f32 %v1442, %v1538
    %v1546 = vmul.f32 %v1539, 10.0
    %v1547 = vmul.f32 %v1540, 10.0
    %v1548 = vmul.f32 %v1541, 10.0
    %v1549 = vmul.f32 %v1542, 10.0
    %v1550 = vmul.f32 %v1543, 10.0
    %v1551 = vmul.f32 %v1544, 10.0
    %v1552 = vmul.f32 %v1545, 10.0
    %v1553 = vmax.f32 %v1546, %v1550
    %v1554 = vmax.f32 %v1547, %v1551
    %v1555 = vsel %vm247, %v1552, -inf
    %v1556 = vmax.f32 %v1548, %v1555
    %v1557 = vmax.f32 %v1553, %v1554
    %v1558 = vmax.f32 %v1556, %v1549
    %v1559 = vmax.f32 %v1557, %v1558
    %1560 = vmax.xlane.f32.xlu0 %v1559
    %v1561 = vpop.xlane.xlu0 %1560
    %v1562 = vsub.f32 %v1546, %v1561
    %v1563 = vsub.f32 %v1547, %v1561
    %v1564 = vsub.f32 %v1548, %v1561
    %v1565 = vsub.f32 %v1549, %v1561
    %v1566 = vsub.f32 %v1550, %v1561
    %v1567 = vsub.f32 %v1551, %v1561
    %v1568 = vsub.f32 %v1552, %v1561
    %v1569 = vmul.f32 %v1562, 1.442695
    %v1570 = vpow.pop %v1569
    %v1571 = vmul.f32 %v1563, 1.442695
    %v1572 = vpow.pop %v1571
    %v1573 = vmul.f32 %v1564, 1.442695
    %v1574 = vpow.pop %v1573
    %v1575 = vmul.f32 %v1565, 1.442695
    %v1576 = vpow.pop %v1575
    %v1577 = vmul.f32 %v1566, 1.442695
    %v1578 = vpow.pop %v1577
    %v1579 = vmul.f32 %v1567, 1.442695
    %v1580 = vpow.pop %v1579
    %v1581 = vmul.f32 %v1568, 1.442695
    %v1582 = vpow.pop %v1581
    %v1583 = vadd.f32 %v1570, %v1572
    %v1584 = vadd.f32 %v1583, %v1574
    %v1585 = vadd.f32 %v1584, %v1576
    %v1586 = vadd.f32 %v1585, %v1578
    %v1587 = vadd.f32 %v1586, %v1580
    %v1588 = vsel %vm247, %v1582, 0.0
    %v1589 = vadd.f32 %v1587, %v1588
    %1590 = vadd.xlane.f32.xlu0 %v1589
    %v1591 = vpop.xlane.xlu0 %1590
    %v1592 = vrcp.pop %v1591
    %v1593 = vmul.f32 %v1591, %v1592
    %v1594 = vsub.f32 1.0, %v1593
    %v1595 = vmul.f32 %v1592, %v1594
    %v1596 = vadd.f32 %v1592, %v1595
    %vm1597 = vweird.f32 %v1591
    %vm1598 = vweird.f32 %v1592
    %vm1599 = vmor %vm1597, %vm1598
    %v1600 = vsel %vm1599, %v1592, %v1596
    %v1601 = vand.u32 2147483647, %v1591
    %vm1602 = vcmp.eq.f32.partialorder %v1601, 8.507059e+37
    %v1603 = vand.u32 %v1591, 2147483648
    %v1604 = vor.u32 1.1754944e-38, %v1603
    %v1605 = vsel %vm1602, %v1604, %v1600
    %v1606 = vmul.f32 %v1570, %v1605
    %v1607 = vmul.f32 %v1572, %v1605
    %v1608 = vmul.f32 %v1574, %v1605
    %v1609 = vmul.f32 %v1576, %v1605
    %v1610 = vmul.f32 %v1578, %v1605
    %v1611 = vmul.f32 %v1580, %v1605
    %v1612 = vmul.f32 %v1582, %v1605
    %v1613 = vmax.f32 %v1524, %v1606
    %v1614 = vmax.f32 %v1525, %v1607
    %v1615 = vmax.f32 %v1526, %v1608
    %v1616 = vmax.f32 %v1527, %v1609
    %v1617 = vmax.f32 %v1528, %v1610
    %v1618 = vmax.f32 %v1529, %v1611
    %v1619 = vmax.f32 %v1530, %v1612
    %s1620 = scalar_lea.vmem %s1, 112
    %v1621 = vld [vmem:[%s1620] sm:$0xff]
    %v1622 = vld [vmem:[%s1620 + $0x8] sm:$0xff]
    %v1623 = vld [vmem:[%s1620 + $0x10] sm:$0xff]
    %v1624 = vld [vmem:[%s1620 + $0x18] sm:$0xff]
    %v1625 = vld [vmem:[%s1620 + $0x20] sm:$0xff]
    %v1626 = vld [vmem:[%s1620 + $0x28] sm:$0xff]
    %v1627 = vld [vmem:[%s1620 + $0x30] sm:$0xff]
    %v1628 = vadd.f32 %v1436, %v1621
    %v1629 = vadd.f32 %v1437, %v1622
    %v1630 = vadd.f32 %v1438, %v1623
    %v1631 = vadd.f32 %v1439, %v1624
    %v1632 = vadd.f32 %v1440, %v1625
    %v1633 = vadd.f32 %v1441, %v1626
    %v1634 = vadd.f32 %v1442, %v1627
    %v1635 = vmul.f32 %v1628, 10.0
    %v1636 = vmul.f32 %v1629, 10.0
    %v1637 = vmul.f32 %v1630, 10.0
    %v1638 = vmul.f32 %v1631, 10.0
    %v1639 = vmul.f32 %v1632, 10.0
    %v1640 = vmul.f32 %v1633, 10.0
    %v1641 = vmul.f32 %v1634, 10.0
    %v1642 = vmax.f32 %v1635, %v1639
    %v1643 = vmax.f32 %v1636, %v1640
    %v1644 = vsel %vm247, %v1641, -inf
    %v1645 = vmax.f32 %v1637, %v1644
    %v1646 = vmax.f32 %v1642, %v1643
    %v1647 = vmax.f32 %v1645, %v1638
    %v1648 = vmax.f32 %v1646, %v1647
    %1649 = vmax.xlane.f32.xlu0 %v1648
    %v1650 = vpop.xlane.xlu0 %1649
    %v1651 = vsub.f32 %v1635, %v1650
    %v1652 = vsub.f32 %v1636, %v1650
    %v1653 = vsub.f32 %v1637, %v1650
    %v1654 = vsub.f32 %v1638, %v1650
    %v1655 = vsub.f32 %v1639, %v1650
    %v1656 = vsub.f32 %v1640, %v1650
    %v1657 = vsub.f32 %v1641, %v1650
    %v1658 = vmul.f32 %v1651, 1.442695
    %v1659 = vpow.pop %v1658
    %v1660 = vmul.f32 %v1652, 1.442695
    %v1661 = vpow.pop %v1660
    %v1662 = vmul.f32 %v1653, 1.442695
    %v1663 = vpow.pop %v1662
    %v1664 = vmul.f32 %v1654, 1.442695
    %v1665 = vpow.pop %v1664
    %v1666 = vmul.f32 %v1655, 1.442695
    %v1667 = vpow.pop %v1666
    %v1668 = vmul.f32 %v1656, 1.442695
    %v1669 = vpow.pop %v1668
    %v1670 = vmul.f32 %v1657, 1.442695
    %v1671 = vpow.pop %v1670
    %v1672 = vadd.f32 %v1659, %v1661
    %v1673 = vadd.f32 %v1672, %v1663
    %v1674 = vadd.f32 %v1673, %v1665
    %v1675 = vadd.f32 %v1674, %v1667
    %v1676 = vadd.f32 %v1675, %v1669
    %v1677 = vsel %vm247, %v1671, 0.0
    %v1678 = vadd.f32 %v1676, %v1677
    %1679 = vadd.xlane.f32.xlu0 %v1678
    %v1680 = vpop.xlane.xlu0 %1679
    %v1681 = vrcp.pop %v1680
    %v1682 = vmul.f32 %v1680, %v1681
    %v1683 = vsub.f32 1.0, %v1682
    %v1684 = vmul.f32 %v1681, %v1683
    %v1685 = vadd.f32 %v1681, %v1684
    %vm1686 = vweird.f32 %v1680
    %vm1687 = vweird.f32 %v1681
    %vm1688 = vmor %vm1686, %vm1687
    %v1689 = vsel %vm1688, %v1681, %v1685
    %v1690 = vand.u32 2147483647, %v1680
    %vm1691 = vcmp.eq.f32.partialorder %v1690, 8.507059e+37
    %v1692 = vand.u32 %v1680, 2147483648
    %v1693 = vor.u32 1.1754944e-38, %v1692
    %v1694 = vsel %vm1691, %v1693, %v1689
    %v1695 = vmul.f32 %v1659, %v1694
    %v1696 = vmul.f32 %v1661, %v1694
    %v1697 = vmul.f32 %v1663, %v1694
    %v1698 = vmul.f32 %v1665, %v1694
    %v1699 = vmul.f32 %v1667, %v1694
    %v1700 = vmul.f32 %v1669, %v1694
    %v1701 = vmul.f32 %v1671, %v1694
    %v1702 = vmax.f32 %v1613, %v1695
    %v1703 = vmax.f32 %v1614, %v1696
    %v1704 = vmax.f32 %v1615, %v1697
    %v1705 = vmax.f32 %v1616, %v1698
    %v1706 = vmax.f32 %v1617, %v1699
    %v1707 = vmax.f32 %v1618, %v1700
    %v1708 = vmax.f32 %v1619, %v1701
    %v1709 = vmul.f32 %v38, %v1702
    %v1710 = vmul.f32 %v39, %v1703
    %v1711 = vmul.f32 %v40, %v1704
    %v1712 = vmul.f32 %v41, %v1705
    %v1713 = vmul.f32 %v42, %v1706
    %v1714 = vmul.f32 %v43, %v1707
    %v1715 = vmul.f32 %v44, %v1708
    %1716 = vst [vmem:[%s10] sm:$0xff] %v1709
    %1717 = vst [vmem:[%s10 + $0x8] sm:$0xff] %v1710
    %1718 = vst [vmem:[%s10 + $0x10] sm:$0xff] %v1711
    %1719 = vst [vmem:[%s10 + $0x18] sm:$0xff] %v1712
    %1720 = vst [vmem:[%s10 + $0x20] sm:$0xff] %v1713
    %1721 = vst [vmem:[%s10 + $0x28] sm:$0xff] %v1714
    %1722 = vst.msk [vmem:[%s10 + $0x30] sm:$0xff] %vm247, %v1715
    // Predicated region
    $region42: #{explainer_mnist_forward.1} parent=1 // pred_check
      _
    $region43: #{explainer_mnist_forward.1} parent=1 // pred_check_branch
      %1724 = sbr.rel (0) target = $region45
    $region44: #{explainer_mnist_forward.1} parent=1 // pred_region
      _
    $region45: #{explainer_mnist_forward.1} parent=1 // pred_fallthru
      _
    // Predicated region
    $region46: #{explainer_mnist_forward.1} parent=1 // pred_check
      _
    $region47: #{explainer_mnist_forward.1} parent=1 // pred_check_branch
      %1726 = sbr.rel (0) target = $region49
    $region48: #{explainer_mnist_forward.1} parent=1 // pred_region
      %1728 = vsyncadd [#allocation3], 0
      %s1730 = sshll.u32 [#allocation2], 4
      %s1731 = int_to_ptr.vmem [resolvable:$true] %s1730
      %s1732 = sshll.u32 %s11, 4
      %s1733 = int_to_ptr.hbm [resolvable:$true] %s1732
      %1735 = dma.vmem_to_hbm [thread:$0]  %s1731, 896, %s1733, [#allocation3]
    $region49: #{explainer_mnist_forward.1} parent=1 // pred_fallthru
      _
    // Predicated region
    $region50: #{explainer_mnist_forward.1} parent=1 // pred_check
      _
    $region51: #{explainer_mnist_forward.1} parent=1 // pred_check_branch
      %1737 = sbr.rel (0) target = $region53
    $region52: #{explainer_mnist_forward.1} parent=1 // pred_region
      _
    $region53: #{explainer_mnist_forward.1} parent=1 // pred_fallthru
      _
    // Predicated region
    $region54: #{explainer_mnist_forward.1} parent=1 // pred_check
      _
    $region55: #{explainer_mnist_forward.1} parent=1 // pred_check_branch
      %1739 = sbr.rel (0) target = $region57
    $region56: #{explainer_mnist_forward.1} parent=1 // pred_region
      %1741 = dma.done [#allocation3], 896
    $region57: #{explainer_mnist_forward.1} parent=1 // pred_fallthru
      _
    %1742 = vsyncpa [#allocation3], 1

</llo_original>
